<compile_context>
chip_gen: v5e
topology: v5e:2x2
jax: 0.10.0
libtpu: 0.0.40
codegen_flags: <defaults>
</compile_context>

<pallas_src>
import jax
import jax.numpy as jnp
from jax.experimental import pallas as pl
from jax.experimental.pallas import tpu as pltpu


def _alpha_readout_kernel(
    s_ref,     # [TN, F]   scalar features
    v_ref,     # [TN, 3F]  vector features, flattened (f, c) -> 3*f + c
    pos_ref,   # [TN, 3]   positions
    w1_ref,    # [F, F]    alpha_0 layer-0 weight (in, out)
    b1_ref,    # [1, F]    alpha_0 layer-0 bias
    w2d_ref,   # [F, 9]    Linear(F,1) weight on the diagonal: w2d[f, 3i+j] = w2[f]*d_ij
    b2d_ref,   # [1, 9]    Linear(F,1) bias on the diagonal:  b2d[0, 3i+j] = b2*d_ij
    wr_ref,    # [3F, 9]   wnu_T @ R  -> nu_i replication pattern straight from v2
    wc_ref,    # [3F, 9]   wnu_T @ C  -> nu_j replication pattern straight from v2
    r_ref,     # [3, 9]    R[i, 3i+j] = 1   (pos_i replication)
    c_ref,     # [3, 9]    C[j, 3i+j] = 1   (pos_j replication)
    out_ref,   # [TN, 9]   out[n, 3i+j]
):
    f32 = jnp.float32

    # --- alpha_0 trunk: Linear(F,F) -> SiLU  (MXU + EUP/VPU) ------------------
    s = s_ref[...].astype(f32)
    h = jnp.dot(s, w1_ref[...].astype(f32), preferred_element_type=f32)
    h = h + b1_ref[...].astype(f32)
    h = h * jax.nn.sigmoid(h)                                     # SiLU

    # --- diag[n, 3i+j] = alpha_0[n] * delta_ij  (Linear(F,1) folded, MXU) -----
    diag = jnp.dot(h, w2d_ref[...].astype(f32), preferred_element_type=f32)
    diag = diag + b2d_ref[...].astype(f32)                        # [TN, 9]

    # --- nu_i / nu_j replication patterns straight from v  (MXU) --------------
    v2 = v_ref[...].astype(f32)                                   # [TN, 3F]
    nu_i = jnp.dot(v2, wr_ref[...].astype(f32), preferred_element_type=f32)   # [TN, 9]
    nu_j = jnp.dot(v2, wc_ref[...].astype(f32), preferred_element_type=f32)   # [TN, 9]

    # --- pos_i / pos_j replication patterns  (tiny constant MXU matmuls) ------
    pos = pos_ref[...].astype(f32)                                # [TN, 3]
    pos_i = jnp.dot(pos, r_ref[...].astype(f32), preferred_element_type=f32)  # [TN, 9]
    pos_j = jnp.dot(pos, c_ref[...].astype(f32), preferred_element_type=f32)  # [TN, 9]

    # --- out[n, 3i+j] = alpha_0 d_ij + nu_i pos_j + pos_i nu_j  (~4 VPU ops) --
    out = diag + nu_i * pos_j + pos_i * nu_j
    out_ref[...] = out.astype(out_ref.dtype)


def _pick_tile_n(N, requested, min_steps=4):
    """Largest multiple-of-128 tile <= requested, shrunk only enough to keep
    >= min_steps grid steps when N allows (v7x megacore / DMA pipelining).
    Per-tile VMEM is tiny relative to every generation's VMEM, so bigger is better."""
    n128 = pl.cdiv(max(N, 1), 128) * 128
    t = min(requested, n128)
    if n128 >= min_steps * 128:
        t = min(t, n128 // min_steps)
    t = max(128, (t // 128) * 128)
    return t


def alpha_equivariant_readout(s, v, pos, params, *, tile_n=2048):
    """
    s   : [N, F]      scalar node features (f32 or bf16)
    v   : [N, F, 3]   vector node features (PyTorch layout; f32 or bf16)
    pos : [N, 3]      positions (f32 or bf16)
    params = (w1 [F,F] (in,out), b1 [1,F], w2 [1,F], b2 [1,1], w_nu [F])
    returns [N, 3, 3] float32
    """
    N, F = s.shape
    assert v.shape == (N, F, 3) and pos.shape == (N, 3)
    w1, b1, w2, b2, w_nu = params
    f32 = jnp.float32

    # Free relayout (no HBM round trip): flatten the trailing (F, 3) dims of v.
    v2 = v.reshape(N, 3 * F)

    # ---- constant weight folding (host-side, tiny) ---------------------------
    eye3 = jnp.eye(3, dtype=f32)
    col = jnp.arange(9)
    R = (col[None, :] // 3 == jnp.arange(3)[:, None]).astype(f32)   # [3, 9], R[i,3i+j]=1
    C = (col[None, :] % 3 == jnp.arange(3)[:, None]).astype(f32)    # [3, 9], C[j,3i+j]=1
    diag_row = eye3.reshape(1, 9)                                   # [1, 9], 1 on 3i+j with i==j

    # VectorLinear weight (transposed, expanded): wnu_T[3f+c, c'] = w_nu[f]*d(c,c')
    wnu_T = (w_nu.astype(f32)[:, None, None] * eye3[None, :, :]).reshape(3 * F, 3)
    wr = wnu_T @ R                                                  # [3F, 9] -> nu_i pattern
    wc = wnu_T @ C                                                  # [3F, 9] -> nu_j pattern

    # Linear(F,1) folded onto the diagonal: diag = h @ w2d + b2d
    w2d = w2.reshape(F, 1).astype(f32) @ diag_row                   # [F, 9]
    b2d = b2.reshape(1, 1).astype(f32) @ diag_row                   # [1, 9]

    b1 = b1.reshape(1, F)

    # ---- tiling / ragged-N padding -------------------------------------------
    tn = _pick_tile_n(N, tile_n)
    n_pad = pl.cdiv(N, tn) * tn
    if n_pad != N:
        pad = n_pad - N
        s_in = jnp.pad(s, ((0, pad), (0, 0)))
        v_in = jnp.pad(v2, ((0, pad), (0, 0)))
        p_in = jnp.pad(pos, ((0, pad), (0, 0)))
    else:
        s_in, v_in, p_in = s, v2, pos
    grid = (n_pad // tn,)

    row = lambda i: (i, 0)
    full = lambda i: (0, 0)

    out9 = pl.pallas_call(
        _alpha_readout_kernel,
        out_shape=jax.ShapeDtypeStruct((n_pad, 9), jnp.float32),
        grid_spec=pltpu.PrefetchScalarGridSpec(
            num_scalar_prefetch=0,
            grid=grid,
            in_specs=[
                pl.BlockSpec((tn, F), row),        # s
                pl.BlockSpec((tn, 3 * F), row),    # v (flattened)
                pl.BlockSpec((tn, 3), row),        # pos
                pl.BlockSpec((F, F), full),        # w1
                pl.BlockSpec((1, F), full),        # b1
                pl.BlockSpec((F, 9), full),        # w2d
                pl.BlockSpec((1, 9), full),        # b2d
                pl.BlockSpec((3 * F, 9), full),    # wr
                pl.BlockSpec((3 * F, 9), full),    # wc
                pl.BlockSpec((3, 9), full),        # R
                pl.BlockSpec((3, 9), full),        # C
            ],
            out_specs=pl.BlockSpec((tn, 9), row),
        ),
        compiler_params=pltpu.CompilerParams(
            dimension_semantics=("parallel",),
        ),
    )(s_in, v_in, p_in, w1, b1, w2d, b2d, wr, wc, R, C)

    # Free reshape: row index 3i+j -> (i, j); drop padded rows.
    return out9[:N].reshape(N, 3, 3)


def reference_readout(s, v, pos, params):
    """Pure-JAX reference matching the PyTorch forward semantics."""
    w1, b1, w2, b2, w_nu = params
    s32 = s.astype(jnp.float32)
    v32 = v.astype(jnp.float32)
    pos32 = pos.astype(jnp.float32)

    h = jnp.dot(s32, w1, precision=jax.lax.Precision.HIGHEST) + b1.reshape(-1)
    h = h * jax.nn.sigmoid(h)
    alpha0 = jnp.einsum('nf,f->n', h, w2.reshape(-1),
                        precision=jax.lax.Precision.HIGHEST) + b2.reshape(())

    nu = jnp.einsum('nfc,f->nc', v32, w_nu)                      # VectorLinear
    eye = jnp.eye(3, dtype=jnp.float32)
    outer1 = jnp.einsum('ni,nj->nij', nu, pos32)
    outer2 = jnp.einsum('ni,nj->nij', pos32, nu)
    return alpha0[:, None, None] * eye[None, :, :] + outer1 + outer2


def make_params(key, F):
    ks = jax.random.split(key, 5)
    scale = 1.0 / jnp.sqrt(F)
    w1 = jax.random.normal(ks[0], (F, F), jnp.float32) * scale
    b1 = jax.random.normal(ks[1], (1, F), jnp.float32) * 0.1
    w2 = jax.random.normal(ks[2], (1, F), jnp.float32) * scale    # Linear(F, 1) weight
    b2 = jax.random.normal(ks[3], (1, 1), jnp.float32) * 0.1
    # VectorLinear weights (torch init is ones; random here for a stronger test)
    w_nu = jax.random.normal(ks[4], (F,), jnp.float32)
    return (w1, b1, w2, b2, w_nu)


if __name__ == "__main__":
    # Small shapes; N deliberately NOT a multiple of 128 to exercise the ragged-N
    # padding path, and large enough that the tile picker emits a multi-step grid.
    N, F = 500, 32

    key = jax.random.PRNGKey(0)
    k_s, k_v, k_pos, k_p = jax.random.split(key, 4)

    s = jax.random.normal(k_s, (N, F), jnp.float32)
    # v is the dominant HBM tensor; store it as bf16. The kernel upcasts to f32
    # before any arithmetic, so this is safe on all generations.
    v = jax.random.normal(k_v, (N, F, 3), jnp.float32).astype(jnp.bfloat16)
    pos = jax.random.normal(k_pos, (N, 3), jnp.float32)
    params = make_params(k_p, F)

    out = alpha_equivariant_readout(s, v, pos, params)
    out = jax.block_until_ready(out)

    ref = reference_readout(s, v, pos, params)
    if not jnp.allclose(out, ref, atol=5e-4, rtol=5e-4):
        max_err = jnp.max(jnp.abs(out - ref))
        raise AssertionError(
            f"Pallas kernel output does not match reference (max abs err = {max_err})")

    print("KERNEL_OK")
</pallas_src>

<mosaic_0001>
module attributes {stable_mosaic.version = 11 : i64} {
  func.func @_alpha_readout_kernel(%arg0: i32, %arg1: memref<128x32xf32, #tpu.memory_space<vmem>>, %arg2: memref<128x96xbf16, #tpu.memory_space<vmem>>, %arg3: memref<128x3xf32, #tpu.memory_space<vmem>>, %arg4: memref<32x32xf32, #tpu.memory_space<vmem>>, %arg5: memref<1x32xf32, #tpu.memory_space<vmem>>, %arg6: memref<32x9xf32, #tpu.memory_space<vmem>>, %arg7: memref<1x9xf32, #tpu.memory_space<vmem>>, %arg8: memref<96x9xf32, #tpu.memory_space<vmem>>, %arg9: memref<96x9xf32, #tpu.memory_space<vmem>>, %arg10: memref<3x9xf32, #tpu.memory_space<vmem>>, %arg11: memref<3x9xf32, #tpu.memory_space<vmem>>, %arg12: memref<128x9xf32, #tpu.memory_space<vmem>>) attributes {dimension_semantics = [#tpu.dimension_semantics<parallel>], iteration_bounds = array<i64: 4>, scalar_prefetch = 0 : i64, scratch_operands = 0 : i64, tpu.core_type = #tpu.core_type<tc>, window_params = [{transform_indices = @transform_0, window_bounds = array<i64: 128, 32>}, {transform_indices = @transform_1, window_bounds = array<i64: 128, 96>}, {transform_indices = @transform_2, window_bounds = array<i64: 128, 3>}, {pipeline_mode = #tpu.pipeline_mode<synchronous>, transform_indices = @transform_3, window_bounds = array<i64: 32, 32>}, {pipeline_mode = #tpu.pipeline_mode<synchronous>, transform_indices = @transform_4, window_bounds = array<i64: 1, 32>}, {pipeline_mode = #tpu.pipeline_mode<synchronous>, transform_indices = @transform_5, window_bounds = array<i64: 32, 9>}, {pipeline_mode = #tpu.pipeline_mode<synchronous>, transform_indices = @transform_6, window_bounds = array<i64: 1, 9>}, {pipeline_mode = #tpu.pipeline_mode<synchronous>, transform_indices = @transform_7, window_bounds = array<i64: 96, 9>}, {pipeline_mode = #tpu.pipeline_mode<synchronous>, transform_indices = @transform_8, window_bounds = array<i64: 96, 9>}, {pipeline_mode = #tpu.pipeline_mode<synchronous>, transform_indices = @transform_9, window_bounds = array<i64: 3, 9>}, {pipeline_mode = #tpu.pipeline_mode<synchronous>, transform_indices = @transform_10, window_bounds = array<i64: 3, 9>}, {transform_indices = @transform_11, window_bounds = array<i64: 128, 9>}]} {
    %c0 = arith.constant 0 : index
    %c0_0 = arith.constant 0 : index
    %0 = vector.load %arg1[%c0, %c0_0] : memref<128x32xf32, #tpu.memory_space<vmem>>, vector<128x32xf32>
    %c0_1 = arith.constant 0 : index
    %c0_2 = arith.constant 0 : index
    %1 = vector.load %arg4[%c0_1, %c0_2] : memref<32x32xf32, #tpu.memory_space<vmem>>, vector<32x32xf32>
    %cst = arith.constant dense<0.000000e+00> : vector<128x32xf32>
    %2 = tpu.matmul %0, %1, %cst {dimension_numbers = #tpu.dot_dimension_numbers<[1], [0], [0], [1], [0, 0, 1, 1], [], []>} : vector<128x32xf32>, vector<32x32xf32>, vector<128x32xf32> -> vector<128x32xf32>
    %c0_3 = arith.constant 0 : index
    %c0_4 = arith.constant 0 : index
    %3 = vector.load %arg5[%c0_3, %c0_4] : memref<1x32xf32, #tpu.memory_space<vmem>>, vector<1x32xf32>
    %4 = vector.broadcast %3 : vector<1x32xf32> to vector<128x32xf32>
    %5 = arith.addf %2, %4 : vector<128x32xf32>
    %6 = arith.negf %5 : vector<128x32xf32>
    %7 = math.exp %6 : vector<128x32xf32>
    %cst_5 = arith.constant 1.000000e+00 : f32
    %8 = vector.broadcast %cst_5 : f32 to vector<128x32xf32>
    %9 = arith.addf %8, %7 : vector<128x32xf32>
    %10 = arith.divf %8, %9 : vector<128x32xf32>
    %11 = arith.mulf %5, %10 : vector<128x32xf32>
    %c0_6 = arith.constant 0 : index
    %c0_7 = arith.constant 0 : index
    %12 = vector.load %arg6[%c0_6, %c0_7] : memref<32x9xf32, #tpu.memory_space<vmem>>, vector<32x9xf32>
    %cst_8 = arith.constant dense<0.000000e+00> : vector<128x9xf32>
    %13 = tpu.matmul %11, %12, %cst_8 {dimension_numbers = #tpu.dot_dimension_numbers<[1], [0], [0], [1], [0, 0, 1, 1], [], []>} : vector<128x32xf32>, vector<32x9xf32>, vector<128x9xf32> -> vector<128x9xf32>
    %c0_9 = arith.constant 0 : index
    %c0_10 = arith.constant 0 : index
    %14 = vector.load %arg7[%c0_9, %c0_10] : memref<1x9xf32, #tpu.memory_space<vmem>>, vector<1x9xf32>
    %15 = vector.broadcast %14 : vector<1x9xf32> to vector<128x9xf32>
    %16 = arith.addf %13, %15 : vector<128x9xf32>
    %c0_11 = arith.constant 0 : index
    %c0_12 = arith.constant 0 : index
    %17 = vector.load %arg2[%c0_11, %c0_12] : memref<128x96xbf16, #tpu.memory_space<vmem>>, vector<128x96xbf16>
    %18 = arith.extf %17 : vector<128x96xbf16> to vector<128x96xf32>
    %c0_13 = arith.constant 0 : index
    %c0_14 = arith.constant 0 : index
    %19 = vector.load %arg8[%c0_13, %c0_14] : memref<96x9xf32, #tpu.memory_space<vmem>>, vector<96x9xf32>
    %cst_15 = arith.constant dense<0.000000e+00> : vector<128x9xf32>
    %20 = tpu.matmul %18, %19, %cst_15 {dimension_numbers = #tpu.dot_dimension_numbers<[1], [0], [0], [1], [0, 0, 1, 1], [], []>} : vector<128x96xf32>, vector<96x9xf32>, vector<128x9xf32> -> vector<128x9xf32>
    %c0_16 = arith.constant 0 : index
    %c0_17 = arith.constant 0 : index
    %21 = vector.load %arg9[%c0_16, %c0_17] : memref<96x9xf32, #tpu.memory_space<vmem>>, vector<96x9xf32>
    %cst_18 = arith.constant dense<0.000000e+00> : vector<128x9xf32>
    %22 = tpu.matmul %18, %21, %cst_18 {dimension_numbers = #tpu.dot_dimension_numbers<[1], [0], [0], [1], [0, 0, 1, 1], [], []>} : vector<128x96xf32>, vector<96x9xf32>, vector<128x9xf32> -> vector<128x9xf32>
    %c0_19 = arith.constant 0 : index
    %c0_20 = arith.constant 0 : index
    %23 = vector.load %arg3[%c0_19, %c0_20] : memref<128x3xf32, #tpu.memory_space<vmem>>, vector<128x3xf32>
    %c0_21 = arith.constant 0 : index
    %c0_22 = arith.constant 0 : index
    %24 = vector.load %arg10[%c0_21, %c0_22] : memref<3x9xf32, #tpu.memory_space<vmem>>, vector<3x9xf32>
    %cst_23 = arith.constant dense<0.000000e+00> : vector<128x9xf32>
    %25 = tpu.matmul %23, %24, %cst_23 {dimension_numbers = #tpu.dot_dimension_numbers<[1], [0], [0], [1], [0, 0, 1, 1], [], []>} : vector<128x3xf32>, vector<3x9xf32>, vector<128x9xf32> -> vector<128x9xf32>
    %c0_24 = arith.constant 0 : index
    %c0_25 = arith.constant 0 : index
    %26 = vector.load %arg11[%c0_24, %c0_25] : memref<3x9xf32, #tpu.memory_space<vmem>>, vector<3x9xf32>
    %cst_26 = arith.constant dense<0.000000e+00> : vector<128x9xf32>
    %27 = tpu.matmul %23, %26, %cst_26 {dimension_numbers = #tpu.dot_dimension_numbers<[1], [0], [0], [1], [0, 0, 1, 1], [], []>} : vector<128x3xf32>, vector<3x9xf32>, vector<128x9xf32> -> vector<128x9xf32>
    %28 = arith.mulf %20, %27 : vector<128x9xf32>
    %29 = arith.addf %16, %28 : vector<128x9xf32>
    %30 = arith.mulf %25, %22 : vector<128x9xf32>
    %31 = arith.addf %29, %30 : vector<128x9xf32>
    %c0_27 = arith.constant 0 : index
    %c0_28 = arith.constant 0 : index
    %32 = vector.load %arg12[%c0_27, %c0_28] : memref<128x9xf32, #tpu.memory_space<vmem>>, vector<128x9xf32>
    tpu.vector_store %arg12[%c0_27, %c0_28], %31 {strides = array<i32>} : memref<128x9xf32, #tpu.memory_space<vmem>>, vector<128x9xf32>,
    return
  }
  func.func @transform_0(%arg0: i32) -> (i32, i32) {
    %c0_i32 = arith.constant 0 : i32
    %c0_i32_0 = arith.constant 0 : i32
    return %arg0, %c0_i32 : i32, i32
  }
  func.func @transform_1(%arg0: i32) -> (i32, i32) {
    %c0_i32 = arith.constant 0 : i32
    %c0_i32_0 = arith.constant 0 : i32
    return %arg0, %c0_i32 : i32, i32
  }
  func.func @transform_2(%arg0: i32) -> (i32, i32) {
    %c0_i32 = arith.constant 0 : i32
    %c0_i32_0 = arith.constant 0 : i32
    return %arg0, %c0_i32 : i32, i32
  }
  func.func @transform_3(%arg0: i32) -> (i32, i32) {
    %c0_i32 = arith.constant 0 : i32
    %c0_i32_0 = arith.constant 0 : i32
    %c0_i32_1 = arith.constant 0 : i32
    return %c0_i32, %c0_i32_0 : i32, i32
  }
  func.func @transform_4(%arg0: i32) -> (i32, i32) {
    %c0_i32 = arith.constant 0 : i32
    %c0_i32_0 = arith.constant 0 : i32
    %c0_i32_1 = arith.constant 0 : i32
    return %c0_i32, %c0_i32_0 : i32, i32
  }
  func.func @transform_5(%arg0: i32) -> (i32, i32) {
    %c0_i32 = arith.constant 0 : i32
    %c0_i32_0 = arith.constant 0 : i32
    %c0_i32_1 = arith.constant 0 : i32
    return %c0_i32, %c0_i32_0 : i32, i32
  }
  func.func @transform_6(%arg0: i32) -> (i32, i32) {
    %c0_i32 = arith.constant 0 : i32
    %c0_i32_0 = arith.constant 0 : i32
    %c0_i32_1 = arith.constant 0 : i32
    return %c0_i32, %c0_i32_0 : i32, i32
  }
  func.func @transform_7(%arg0: i32) -> (i32, i32) {
    %c0_i32 = arith.constant 0 : i32
    %c0_i32_0 = arith.constant 0 : i32
    %c0_i32_1 = arith.constant 0 : i32
    return %c0_i32, %c0_i32_0 : i32, i32
  }
  func.func @transform_8(%arg0: i32) -> (i32, i32) {
    %c0_i32 = arith.constant 0 : i32
    %c0_i32_0 = arith.constant 0 : i32
    %c0_i32_1 = arith.constant 0 : i32
    return %c0_i32, %c0_i32_0 : i32, i32
  }
  func.func @transform_9(%arg0: i32) -> (i32, i32) {
    %c0_i32 = arith.constant 0 : i32
    %c0_i32_0 = arith.constant 0 : i32
    %c0_i32_1 = arith.constant 0 : i32
    return %c0_i32, %c0_i32_0 : i32, i32
  }
  func.func @transform_10(%arg0: i32) -> (i32, i32) {
    %c0_i32 = arith.constant 0 : i32
    %c0_i32_0 = arith.constant 0 : i32
    %c0_i32_1 = arith.constant 0 : i32
    return %c0_i32, %c0_i32_0 : i32, i32
  }
  func.func @transform_11(%arg0: i32) -> (i32, i32) {
    %c0_i32 = arith.constant 0 : i32
    %c0_i32_0 = arith.constant 0 : i32
    return %arg0, %c0_i32 : i32, i32
  }
}

</mosaic_0001>

<llo_original>
// kernel: tpu_custom_call.1
$region0: #{tpu_custom_call.1}
  #allocation0 [shape = 'u32[]', space=smem, size = 0x4, offset = 0x4, fixed_abs, tag = 'smem constant byte address 0x4 - core index']
  #allocation1 [shape = 'u32[72,128]{1,0:T(1,128)}', space=vmem, size = 0x9000, scoped, tag = 'internal scratch']
  %s0 = inlined_call_operand.vmem [shape: f32[512,32], index: 0, kind: input, shape index: {}]
  %s1 = inlined_call_operand.vmem [shape: bf16[512,96], index: 1, kind: input, shape index: {}]
  %s2 = inlined_call_operand.vmem [shape: f32[512,3], index: 2, kind: input, shape index: {}]
  %s3 = inlined_call_operand.vmem [shape: f32[32,32], index: 3, kind: input, shape index: {}]
  %s4 = inlined_call_operand.vmem [shape: f32[1,32], index: 4, kind: input, shape index: {}]
  %s5 = inlined_call_operand.vmem [shape: f32[32,9], index: 5, kind: input, shape index: {}]
  %s6 = inlined_call_operand.vmem [shape: f32[1,9], index: 6, kind: input, shape index: {}]
  %s7 = inlined_call_operand.vmem [shape: f32[96,9], index: 7, kind: input, shape index: {}]
  %s8 = inlined_call_operand.vmem [shape: f32[96,9], index: 8, kind: input, shape index: {}]
  %s9 = inlined_call_operand.vmem [shape: f32[3,9], index: 9, kind: input, shape index: {}]
  %s10 = inlined_call_operand.vmem [shape: f32[3,9], index: 10, kind: input, shape index: {}]
  %s11 = inlined_call_operand.vmem [shape: f32[512,9], index: 11, kind: output, shape index: {}]
  %s12 = sld [smem:[#allocation0]]
  $region77: #{tpu_custom_call.1} parent=0
    _
  %s14 = ssub.s32 1, %s12
  %s15 = scalar_select 0, %s14, %s12
  loop: start=0, step=1, limit=6
  $region2: #{tpu_custom_call.1} parent=0 // loop_pre_header
    _
  $region3: #{tpu_custom_call.1} parent=0 // loop_header
    %s17 = sphi 0, %s21
    %p18 = scmp.ge.s32.totalorder %s17, 6
    %s27 = sphi 0, %s29
    %s30 = sphi 0, %s27
    %s31 = sphi 0, %s30
    %s47 = sphi 0, %s31
    %s53 = sphi 0, %s55
    %s56 = sphi 0, %s53
    %s57 = sphi 0, %s56
    %s73 = sphi 0, %s57
    %s79 = sphi 0, %s81
    %s82 = sphi 0, %s79
    %s83 = sphi 0, %s82
    %s99 = sphi 0, %s83
    %s103 = sphi 0, %s103
    %s105 = sphi 0, %s103
    %s106 = sphi 0, %s105
    %s120 = sphi 0, %s106
    %s124 = sphi 0, %s124
    %s126 = sphi 0, %s124
    %s127 = sphi 0, %s126
    %s141 = sphi 0, %s127
    %s145 = sphi 0, %s145
    %s147 = sphi 0, %s145
    %s148 = sphi 0, %s147
    %s162 = sphi 0, %s148
    %s166 = sphi 0, %s166
    %s168 = sphi 0, %s166
    %s169 = sphi 0, %s168
    %s183 = sphi 0, %s169
    %s187 = sphi 0, %s187
    %s189 = sphi 0, %s187
    %s190 = sphi 0, %s189
    %s204 = sphi 0, %s190
    %s208 = sphi 0, %s208
    %s210 = sphi 0, %s208
    %s211 = sphi 0, %s210
    %s225 = sphi 0, %s211
    %s229 = sphi 0, %s229
    %s231 = sphi 0, %s229
    %s232 = sphi 0, %s231
    %s246 = sphi 0, %s232
    %s250 = sphi 0, %s250
    %s252 = sphi 0, %s250
    %s253 = sphi 0, %s252
    %s267 = sphi 0, %s253
    %s273 = sphi 0, %s275
    %s276 = sphi 0, %s273
    %s277 = sphi 0, %s276
    %s293 = sphi 0, %s277
  $region4: #{tpu_custom_call.1} parent=0 // loop_header_branch
    %20 = sbr.rel (%p18) target = $region8
  $region5: #{tpu_custom_call.1} parent=0 // loop_body
    %s22 = ssub.s32 %s17, 1
    %s23 = ssub.s32 %s17, 2
    %s24 = sadd.s32 %s17, 1
    %s25 = ssub.s32 %s17, %s24
    %p26 = scmp.eq.s32.totalorder %s25, 0
    %s28 = sadd.s32 %s27, 1
    %s29 = scalar_select %p26, %s27, %s28
    %p32 = pneg %p26
    %p33 = scmp.eq.s32.totalorder %s17, 3
    %p34 = por %p32, %p33
    %p35 = scmp.ne.s32.totalorder %s27, %s30
    %p36 = scmp.eq.s32.totalorder %s17, 0
    %p37 = por %p35, %p36
    %p38 = scmp.ne.s32.totalorder %s27, %s30
    %p39 = scmp.eq.s32.totalorder %s22, 3
    %p40 = por %p38, %p39
    %p41 = scmp.ne.s32.totalorder %s30, %s31
    %p42 = scmp.eq.s32.totalorder %s22, 0
    %p43 = por %p41, %p42
    %p44 = scmp.ne.s32.totalorder %s30, %s31
    %p45 = scmp.eq.s32.totalorder %s23, 3
    %p46 = por %p44, %p45
    %p48 = scmp.ne.s32.totalorder %s31, %s47
    %p49 = scmp.eq.s32.totalorder %s23, 0
    %p50 = por %p48, %p49
    %s51 = ssub.s32 %s17, %s24
    %p52 = scmp.eq.s32.totalorder %s51, 0
    %s54 = sadd.s32 %s53, 1
    %s55 = scalar_select %p52, %s53, %s54
    %p58 = pneg %p52
    %p59 = scmp.eq.s32.totalorder %s17, 3
    %p60 = por %p58, %p59
    %p61 = scmp.ne.s32.totalorder %s53, %s56
    %p62 = scmp.eq.s32.totalorder %s17, 0
    %p63 = por %p61, %p62
    %p64 = scmp.ne.s32.totalorder %s53, %s56
    %p65 = scmp.eq.s32.totalorder %s22, 3
    %p66 = por %p64, %p65
    %p67 = scmp.ne.s32.totalorder %s56, %s57
    %p68 = scmp.eq.s32.totalorder %s22, 0
    %p69 = por %p67, %p68
    %p70 = scmp.ne.s32.totalorder %s56, %s57
    %p71 = scmp.eq.s32.totalorder %s23, 3
    %p72 = por %p70, %p71
    %p74 = scmp.ne.s32.totalorder %s57, %s73
    %p75 = scmp.eq.s32.totalorder %s23, 0
    %p76 = por %p74, %p75
    %s77 = ssub.s32 %s17, %s24
    %p78 = scmp.eq.s32.totalorder %s77, 0
    %s80 = sadd.s32 %s79, 1
    %s81 = scalar_select %p78, %s79, %s80
    %p84 = pneg %p78
    %p85 = scmp.eq.s32.totalorder %s17, 3
    %p86 = por %p84, %p85
    %p87 = scmp.ne.s32.totalorder %s79, %s82
    %p88 = scmp.eq.s32.totalorder %s17, 0
    %p89 = por %p87, %p88
    %p90 = scmp.ne.s32.totalorder %s79, %s82
    %p91 = scmp.eq.s32.totalorder %s22, 3
    %p92 = por %p90, %p91
    %p93 = scmp.ne.s32.totalorder %s82, %s83
    %p94 = scmp.eq.s32.totalorder %s22, 0
    %p95 = por %p93, %p94
    %p96 = scmp.ne.s32.totalorder %s82, %s83
    %p97 = scmp.eq.s32.totalorder %s23, 3
    %p98 = por %p96, %p97
    %p100 = scmp.ne.s32.totalorder %s83, %s99
    %p101 = scmp.eq.s32.totalorder %s23, 0
    %p102 = por %p100, %p101
    %s104 = sadd.s32 %s103, 1
    %p107 = scmp.eq.s32.totalorder %s17, 3
    %p108 = scmp.ne.s32.totalorder %s103, %s105
    %p109 = scmp.eq.s32.totalorder %s17, 0
    %p110 = por %p108, %p109
    %p111 = scmp.ne.s32.totalorder %s103, %s105
    %p112 = scmp.eq.s32.totalorder %s22, 3
    %p113 = por %p111, %p112
    %p114 = scmp.ne.s32.totalorder %s105, %s106
    %p115 = scmp.eq.s32.totalorder %s22, 0
    %p116 = por %p114, %p115
    %p117 = scmp.ne.s32.totalorder %s105, %s106
    %p118 = scmp.eq.s32.totalorder %s23, 3
    %p119 = por %p117, %p118
    %p121 = scmp.ne.s32.totalorder %s106, %s120
    %p122 = scmp.eq.s32.totalorder %s23, 0
    %p123 = por %p121, %p122
    %s125 = sadd.s32 %s124, 1
    %p128 = scmp.eq.s32.totalorder %s17, 3
    %p129 = scmp.ne.s32.totalorder %s124, %s126
    %p130 = scmp.eq.s32.totalorder %s17, 0
    %p131 = por %p129, %p130
    %p132 = scmp.ne.s32.totalorder %s124, %s126
    %p133 = scmp.eq.s32.totalorder %s22, 3
    %p134 = por %p132, %p133
    %p135 = scmp.ne.s32.totalorder %s126, %s127
    %p136 = scmp.eq.s32.totalorder %s22, 0
    %p137 = por %p135, %p136
    %p138 = scmp.ne.s32.totalorder %s126, %s127
    %p139 = scmp.eq.s32.totalorder %s23, 3
    %p140 = por %p138, %p139
    %p142 = scmp.ne.s32.totalorder %s127, %s141
    %p143 = scmp.eq.s32.totalorder %s23, 0
    %p144 = por %p142, %p143
    %s146 = sadd.s32 %s145, 1
    %p149 = scmp.eq.s32.totalorder %s17, 3
    %p150 = scmp.ne.s32.totalorder %s145, %s147
    %p151 = scmp.eq.s32.totalorder %s17, 0
    %p152 = por %p150, %p151
    %p153 = scmp.ne.s32.totalorder %s145, %s147
    %p154 = scmp.eq.s32.totalorder %s22, 3
    %p155 = por %p153, %p154
    %p156 = scmp.ne.s32.totalorder %s147, %s148
    %p157 = scmp.eq.s32.totalorder %s22, 0
    %p158 = por %p156, %p157
    %p159 = scmp.ne.s32.totalorder %s147, %s148
    %p160 = scmp.eq.s32.totalorder %s23, 3
    %p161 = por %p159, %p160
    %p163 = scmp.ne.s32.totalorder %s148, %s162
    %p164 = scmp.eq.s32.totalorder %s23, 0
    %p165 = por %p163, %p164
    %s167 = sadd.s32 %s166, 1
    %p170 = scmp.eq.s32.totalorder %s17, 3
    %p171 = scmp.ne.s32.totalorder %s166, %s168
    %p172 = scmp.eq.s32.totalorder %s17, 0
    %p173 = por %p171, %p172
    %p174 = scmp.ne.s32.totalorder %s166, %s168
    %p175 = scmp.eq.s32.totalorder %s22, 3
    %p176 = por %p174, %p175
    %p177 = scmp.ne.s32.totalorder %s168, %s169
    %p178 = scmp.eq.s32.totalorder %s22, 0
    %p179 = por %p177, %p178
    %p180 = scmp.ne.s32.totalorder %s168, %s169
    %p181 = scmp.eq.s32.totalorder %s23, 3
    %p182 = por %p180, %p181
    %p184 = scmp.ne.s32.totalorder %s169, %s183
    %p185 = scmp.eq.s32.totalorder %s23, 0
    %p186 = por %p184, %p185
    %s188 = sadd.s32 %s187, 1
    %p191 = scmp.eq.s32.totalorder %s17, 3
    %p192 = scmp.ne.s32.totalorder %s187, %s189
    %p193 = scmp.eq.s32.totalorder %s17, 0
    %p194 = por %p192, %p193
    %p195 = scmp.ne.s32.totalorder %s187, %s189
    %p196 = scmp.eq.s32.totalorder %s22, 3
    %p197 = por %p195, %p196
    %p198 = scmp.ne.s32.totalorder %s189, %s190
    %p199 = scmp.eq.s32.totalorder %s22, 0
    %p200 = por %p198, %p199
    %p201 = scmp.ne.s32.totalorder %s189, %s190
    %p202 = scmp.eq.s32.totalorder %s23, 3
    %p203 = por %p201, %p202
    %p205 = scmp.ne.s32.totalorder %s190, %s204
    %p206 = scmp.eq.s32.totalorder %s23, 0
    %p207 = por %p205, %p206
    %s209 = sadd.s32 %s208, 1
    %p212 = scmp.eq.s32.totalorder %s17, 3
    %p213 = scmp.ne.s32.totalorder %s208, %s210
    %p214 = scmp.eq.s32.totalorder %s17, 0
    %p215 = por %p213, %p214
    %p216 = scmp.ne.s32.totalorder %s208, %s210
    %p217 = scmp.eq.s32.totalorder %s22, 3
    %p218 = por %p216, %p217
    %p219 = scmp.ne.s32.totalorder %s210, %s211
    %p220 = scmp.eq.s32.totalorder %s22, 0
    %p221 = por %p219, %p220
    %p222 = scmp.ne.s32.totalorder %s210, %s211
    %p223 = scmp.eq.s32.totalorder %s23, 3
    %p224 = por %p222, %p223
    %p226 = scmp.ne.s32.totalorder %s211, %s225
    %p227 = scmp.eq.s32.totalorder %s23, 0
    %p228 = por %p226, %p227
    %s230 = sadd.s32 %s229, 1
    %p233 = scmp.eq.s32.totalorder %s17, 3
    %p234 = scmp.ne.s32.totalorder %s229, %s231
    %p235 = scmp.eq.s32.totalorder %s17, 0
    %p236 = por %p234, %p235
    %p237 = scmp.ne.s32.totalorder %s229, %s231
    %p238 = scmp.eq.s32.totalorder %s22, 3
    %p239 = por %p237, %p238
    %p240 = scmp.ne.s32.totalorder %s231, %s232
    %p241 = scmp.eq.s32.totalorder %s22, 0
    %p242 = por %p240, %p241
    %p243 = scmp.ne.s32.totalorder %s231, %s232
    %p244 = scmp.eq.s32.totalorder %s23, 3
    %p245 = por %p243, %p244
    %p247 = scmp.ne.s32.totalorder %s232, %s246
    %p248 = scmp.eq.s32.totalorder %s23, 0
    %p249 = por %p247, %p248
    %s251 = sadd.s32 %s250, 1
    %p254 = scmp.eq.s32.totalorder %s17, 3
    %p255 = scmp.ne.s32.totalorder %s250, %s252
    %p256 = scmp.eq.s32.totalorder %s17, 0
    %p257 = por %p255, %p256
    %p258 = scmp.ne.s32.totalorder %s250, %s252
    %p259 = scmp.eq.s32.totalorder %s22, 3
    %p260 = por %p258, %p259
    %p261 = scmp.ne.s32.totalorder %s252, %s253
    %p262 = scmp.eq.s32.totalorder %s22, 0
    %p263 = por %p261, %p262
    %p264 = scmp.ne.s32.totalorder %s252, %s253
    %p265 = scmp.eq.s32.totalorder %s23, 3
    %p266 = por %p264, %p265
    %p268 = scmp.ne.s32.totalorder %s253, %s267
    %p269 = scmp.eq.s32.totalorder %s23, 0
    %p270 = por %p268, %p269
    %s271 = ssub.s32 %s17, %s24
    %p272 = scmp.eq.s32.totalorder %s271, 0
    %s274 = sadd.s32 %s273, 1
    %s275 = scalar_select %p272, %s273, %s274
    %p278 = pneg %p272
    %p279 = scmp.eq.s32.totalorder %s17, 3
    %p280 = por %p278, %p279
    %p281 = scmp.ne.s32.totalorder %s273, %s276
    %p282 = scmp.eq.s32.totalorder %s17, 0
    %p283 = por %p281, %p282
    %p284 = scmp.ne.s32.totalorder %s273, %s276
    %p285 = scmp.eq.s32.totalorder %s22, 3
    %p286 = por %p284, %p285
    %p287 = scmp.ne.s32.totalorder %s276, %s277
    %p288 = scmp.eq.s32.totalorder %s22, 0
    %p289 = por %p287, %p288
    %p290 = scmp.ne.s32.totalorder %s276, %s277
    %p291 = scmp.eq.s32.totalorder %s23, 3
    %p292 = por %p290, %p291
    %p294 = scmp.ne.s32.totalorder %s277, %s293
    %p295 = scmp.eq.s32.totalorder %s23, 0
    %p296 = por %p294, %p295
    %p297 = scmp.le.s32.totalorder 1, %s17
    %p298 = scmp.lt.s32.totalorder %s17, 5
    %p299 = pnand %p297, %p298
    %p300 = pneg %p299
    // Predicated region
    $region9: #{tpu_custom_call.1} parent=5 // pred_check
      _
    $region10: #{tpu_custom_call.1} parent=5 // pred_check_branch
      %302 = sbr.rel (%p299) target = $region12
    $region11: #{tpu_custom_call.1} parent=5 // pred_region
      %s303 = ssub.s32 %s17, 1
      // Predicated region
      $region13: #{tpu_custom_call.1} parent=11 // pred_check
        %p304 = pneg %p116
      $region14: #{tpu_custom_call.1} parent=11 // pred_check_branch
        %306 = sbr.rel (%p304) target = $region16
      $region15: #{tpu_custom_call.1} parent=11 // pred_region
        _
      $region16: #{tpu_custom_call.1} parent=11 // pred_fallthru
        _
      // Predicated region
      $region17: #{tpu_custom_call.1} parent=11 // pred_check
        %p307 = pneg %p137
      $region18: #{tpu_custom_call.1} parent=11 // pred_check_branch
        %309 = sbr.rel (%p307) target = $region20
      $region19: #{tpu_custom_call.1} parent=11 // pred_region
        _
      $region20: #{tpu_custom_call.1} parent=11 // pred_fallthru
        _
      // Predicated region
      $region21: #{tpu_custom_call.1} parent=11 // pred_check
        %p310 = pneg %p158
      $region22: #{tpu_custom_call.1} parent=11 // pred_check_branch
        %312 = sbr.rel (%p310) target = $region24
      $region23: #{tpu_custom_call.1} parent=11 // pred_region
        _
      $region24: #{tpu_custom_call.1} parent=11 // pred_fallthru
        _
      // Predicated region
      $region25: #{tpu_custom_call.1} parent=11 // pred_check
        %p313 = pneg %p179
      $region26: #{tpu_custom_call.1} parent=11 // pred_check_branch
        %315 = sbr.rel (%p313) target = $region28
      $region27: #{tpu_custom_call.1} parent=11 // pred_region
        _
      $region28: #{tpu_custom_call.1} parent=11 // pred_fallthru
        _
      // Predicated region
      $region29: #{tpu_custom_call.1} parent=11 // pred_check
        %p316 = pneg %p200
      $region30: #{tpu_custom_call.1} parent=11 // pred_check_branch
        %318 = sbr.rel (%p316) target = $region32
      $region31: #{tpu_custom_call.1} parent=11 // pred_region
        _
      $region32: #{tpu_custom_call.1} parent=11 // pred_fallthru
        _
      // Predicated region
      $region33: #{tpu_custom_call.1} parent=11 // pred_check
        %p319 = pneg %p221
      $region34: #{tpu_custom_call.1} parent=11 // pred_check_branch
        %321 = sbr.rel (%p319) target = $region36
      $region35: #{tpu_custom_call.1} parent=11 // pred_region
        _
      $region36: #{tpu_custom_call.1} parent=11 // pred_fallthru
        _
      // Predicated region
      $region37: #{tpu_custom_call.1} parent=11 // pred_check
        %p322 = pneg %p242
      $region38: #{tpu_custom_call.1} parent=11 // pred_check_branch
        %324 = sbr.rel (%p322) target = $region40
      $region39: #{tpu_custom_call.1} parent=11 // pred_region
        _
      $region40: #{tpu_custom_call.1} parent=11 // pred_fallthru
        _
      // Predicated region
      $region41: #{tpu_custom_call.1} parent=11 // pred_check
        %p325 = pneg %p263
      $region42: #{tpu_custom_call.1} parent=11 // pred_check_branch
        %327 = sbr.rel (%p325) target = $region44
      $region43: #{tpu_custom_call.1} parent=11 // pred_region
        _
      $region44: #{tpu_custom_call.1} parent=11 // pred_fallthru
        _
    $region12: #{tpu_custom_call.1} parent=5 // pred_fallthru
      _
    %p328 = scmp.lt.s32.totalorder %s17, 4
    // Predicated region
    $region45: #{tpu_custom_call.1} parent=5 // pred_check
      %p329 = pneg %p328
    $region46: #{tpu_custom_call.1} parent=5 // pred_check_branch
      %331 = sbr.rel (%p329) target = $region48
    $region47: #{tpu_custom_call.1} parent=5 // pred_region
      // Predicated region
      $region49: #{tpu_custom_call.1} parent=47 // pred_check
        %p332 = pneg %p37
      $region50: #{tpu_custom_call.1} parent=47 // pred_check_branch
        %334 = sbr.rel (%p332) target = $region52
      $region51: #{tpu_custom_call.1} parent=47 // pred_region
        %s335 = smul.u32 16, %s17
        %p336 = scmp.lt.s32.totalorder %s335, 63
        %s337 = scalar_select %p336, %s335, 63
        %s338 = smul.addr %s337, 8
        %s339 = scalar_lea.vmem %s0, %s338
        %s340 = smul.u32 16, %s17
      $region52: #{tpu_custom_call.1} parent=47 // pred_fallthru
        _
      // Predicated region
      $region53: #{tpu_custom_call.1} parent=47 // pred_check
        %p341 = pneg %p63
      $region54: #{tpu_custom_call.1} parent=47 // pred_check_branch
        %343 = sbr.rel (%p341) target = $region56
      $region55: #{tpu_custom_call.1} parent=47 // pred_region
        %s344 = smul.u32 16, %s17
        %p345 = scmp.lt.s32.totalorder %s344, 63
        %s346 = scalar_select %p345, %s344, 63
        %s347 = smul.addr %s346, 4
        %s348 = scalar_lea.vmem %s1, %s347
        %s349 = smul.u32 16, %s17
      $region56: #{tpu_custom_call.1} parent=47 // pred_fallthru
        _
      // Predicated region
      $region57: #{tpu_custom_call.1} parent=47 // pred_check
        %p350 = pneg %p89
      $region58: #{tpu_custom_call.1} parent=47 // pred_check_branch
        %352 = sbr.rel (%p350) target = $region60
      $region59: #{tpu_custom_call.1} parent=47 // pred_region
        %s353 = smul.u32 16, %s17
        %p354 = scmp.lt.s32.totalorder %s353, 63
        %s355 = scalar_select %p354, %s353, 63
        %s356 = smul.addr %s355, 8
        %s357 = scalar_lea.vmem %s2, %s356
        %s358 = smul.u32 16, %s17
      $region60: #{tpu_custom_call.1} parent=47 // pred_fallthru
        _
    $region48: #{tpu_custom_call.1} parent=5 // pred_fallthru
      _
    %p359 = scmp.le.s32.totalorder 1, %s17
    %p360 = scmp.lt.s32.totalorder %s17, 5
    %p361 = pnand %p359, %p360
    %p362 = pneg %p361
    // Predicated region
    $region61: #{tpu_custom_call.1} parent=5 // pred_check
      _
    $region62: #{tpu_custom_call.1} parent=5 // pred_check_branch
      %364 = sbr.rel (%p361) target = $region64
    $region63: #{tpu_custom_call.1} parent=5 // pred_region
      %s365 = ssub.s32 %s17, 1
      %s366 = smul.u32 16, %s22
      %p367 = scmp.lt.s32.totalorder %s366, 63
      %s368 = scalar_select %p367, %s366, 63
      %s369 = smul.addr %s368, 8
      %s370 = scalar_lea.vmem %s0, %s369
      %p371 = pneg %p43
      %p372 = pneg %p40
      %s373 = smul.u32 16, %s22
      %p374 = scmp.lt.s32.totalorder %s373, 63
      %s375 = scalar_select %p374, %s373, 63
      %s376 = smul.addr %s375, 4
      %s377 = scalar_lea.vmem %s1, %s376
      %p378 = pneg %p69
      %p379 = pneg %p66
      %s380 = smul.u32 16, %s22
      %p381 = scmp.lt.s32.totalorder %s380, 63
      %s382 = scalar_select %p381, %s380, 63
      %s383 = smul.addr %s382, 8
      %s384 = scalar_lea.vmem %s2, %s383
      %p385 = pneg %p95
      %p386 = pneg %p92
      %p387 = pneg %p116
      %p388 = pneg %p113
      %p389 = pneg %p137
      %p390 = pneg %p134
      %p391 = pneg %p158
      %p392 = pneg %p155
      %p393 = pneg %p179
      %p394 = pneg %p176
      %p395 = pneg %p200
      %p396 = pneg %p197
      %p397 = pneg %p221
      %p398 = pneg %p218
      %p399 = pneg %p242
      %p400 = pneg %p239
      %p401 = pneg %p263
      %p402 = pneg %p260
      %p403 = pneg %p289
      %p404 = pneg %p286
      %s405 = smul.u32 16, %s22
      %p406 = scmp.lt.s32.totalorder %s405, 63
      %s407 = scalar_select %p406, %s405, 63
      %s408 = smul.addr %s407, 8
      %s409 = scalar_lea.vmem %s11, %s408
      %s410 = smul.u32 16, %s22
      %p411 = scmp.lt.s32.totalorder %s410, 63
      %s412 = scalar_select %p411, %s410, 63
      %s413 = smul.addr %s412, 8
      %s414 = scalar_lea.vmem %s0, %s413
      %s415 = smul.u32 16, %s22
      %s416 = smul.u32 16, %s22
      %p417 = scmp.lt.s32.totalorder %s416, 63
      %s418 = scalar_select %p417, %s416, 63
      %s419 = smul.addr %s418, 4
      %s420 = scalar_lea.vmem %s1, %s419
      %s421 = smul.u32 16, %s22
      %s422 = smul.u32 16, %s22
      %p423 = scmp.lt.s32.totalorder %s422, 63
      %s424 = scalar_select %p423, %s422, 63
      %s425 = smul.addr %s424, 8
      %s426 = scalar_lea.vmem %s2, %s425
      %s427 = smul.u32 16, %s22
      %s428 = smul.u32 16, %s22
      %p429 = scmp.lt.s32.totalorder %s428, 63
      %s430 = scalar_select %p429, %s428, 63
      %s431 = smul.addr %s430, 8
      %s432 = scalar_lea.vmem %s11, %s431
      %s433 = smul.u32 16, %s22
      %v434 = vld [vmem:[%s414] sm:$0xff]
      %v435 = vld [vmem:[%s414 + $0x8] sm:$0xff]
      %v436 = vld [vmem:[%s414 + $0x10] sm:$0xff]
      %v437 = vld [vmem:[%s414 + $0x18] sm:$0xff]
      %v438 = vld [vmem:[%s414 + $0x20] sm:$0xff]
      %v439 = vld [vmem:[%s414 + $0x28] sm:$0xff]
      %v440 = vld [vmem:[%s414 + $0x30] sm:$0xff]
      %v441 = vld [vmem:[%s414 + $0x38] sm:$0xff]
      %v442 = vld [vmem:[%s414 + $0x40] sm:$0xff]
      %v443 = vld [vmem:[%s414 + $0x48] sm:$0xff]
      %v444 = vld [vmem:[%s414 + $0x50] sm:$0xff]
      %v445 = vld [vmem:[%s414 + $0x58] sm:$0xff]
      %v446 = vld [vmem:[%s414 + $0x60] sm:$0xff]
      %v447 = vld [vmem:[%s414 + $0x68] sm:$0xff]
      %v448 = vld [vmem:[%s414 + $0x70] sm:$0xff]
      %v449 = vld [vmem:[%s414 + $0x78] sm:$0xff]
      %v450 = vld [vmem:[%s3] sm:$0xff]
      %v451 = vld [vmem:[%s3 + $0x8] sm:$0xff]
      %v452 = vld [vmem:[%s3 + $0x10] sm:$0xff]
      %v453 = vld [vmem:[%s3 + $0x18] sm:$0xff]
      %v454 = vld [vmem:[%s4] sm:$0x1]
      %v456 = vperm.slane %v454, 0
      %vm458 = vcmask 261120
      %v460 = vsel %vm458, %v434, 0
      %v463 = vsel %vm458, %v435, 0
      %v466 = vsel %vm458, %v436, 0
      %v469 = vsel %vm458, %v437, 0
      %v472 = vsel %vm458, %v438, 0
      %v475 = vsel %vm458, %v439, 0
      %v478 = vsel %vm458, %v440, 0
      %v481 = vsel %vm458, %v441, 0
      %v484 = vsel %vm458, %v442, 0
      %v487 = vsel %vm458, %v443, 0
      %v490 = vsel %vm458, %v444, 0
      %v493 = vsel %vm458, %v445, 0
      %v496 = vsel %vm458, %v446, 0
      %v499 = vsel %vm458, %v447, 0
      %v502 = vsel %vm458, %v448, 0
      %v505 = vsel %vm458, %v449, 0
      %507 = vmatpush.msra.mxu0 0.0
      %508 = vmatpush.msra.mxu0 0.0
      %509 = vmatpush.msra.mxu0 0.0
      %510 = vmatpush.msra.mxu0 0.0
      %511 = vmatpush.msra.mxu0 0.0
      %512 = vmatpush.msra.mxu0 0.0
      %513 = vmatpush.msra.mxu0 0.0
      %514 = vmatpush.msra.mxu0 0.0
      %515 = vmatpush.msra.mxu0 0.0
      %516 = vmatpush.msra.mxu0 0.0
      %517 = vmatpush.msra.mxu0 0.0
      %518 = vmatpush.msra.mxu0 0.0
      %519 = vmatpush.msra.mxu0 %v453
      %520 = vmatpush.msra.mxu0 %v452
      %521 = vmatpush.msra.mxu0 %v451
      %522 = vmatpush.msra.mxu0 %v450
      %523 = vmatmul.f32.gmra.mxu0 %v460
      %v524 = vpop.f32.mrf.mxu0
      %v525 = vadd.f32 %v456, %v524
      %526 = vmatmul.f32.gmra.mxu0 %v463
      %v527 = vpop.f32.mrf.mxu0
      %v528 = vadd.f32 %v456, %v527
      %529 = vmatmul.f32.gmra.mxu0 %v466
      %v530 = vpop.f32.mrf.mxu0
      %v531 = vadd.f32 %v456, %v530
      %532 = vmatmul.f32.gmra.mxu0 %v469
      %v533 = vpop.f32.mrf.mxu0
      %v534 = vadd.f32 %v456, %v533
      %535 = vmatmul.f32.gmra.mxu0 %v472
      %v536 = vpop.f32.mrf.mxu0
      %v537 = vadd.f32 %v456, %v536
      %538 = vmatmul.f32.gmra.mxu0 %v475
      %v539 = vpop.f32.mrf.mxu0
      %v540 = vadd.f32 %v456, %v539
      %541 = vmatmul.f32.gmra.mxu0 %v478
      %v542 = vpop.f32.mrf.mxu0
      %v543 = vadd.f32 %v456, %v542
      %544 = vmatmul.f32.gmra.mxu0 %v481
      %v545 = vpop.f32.mrf.mxu0
      %v546 = vadd.f32 %v456, %v545
      %547 = vmatmul.f32.gmra.mxu0 %v484
      %v548 = vpop.f32.mrf.mxu0
      %v549 = vadd.f32 %v456, %v548
      %550 = vmatmul.f32.gmra.mxu0 %v487
      %v551 = vpop.f32.mrf.mxu0
      %v552 = vadd.f32 %v456, %v551
      %553 = vmatmul.f32.gmra.mxu0 %v490
      %v554 = vpop.f32.mrf.mxu0
      %v555 = vadd.f32 %v456, %v554
      %556 = vmatmul.f32.gmra.mxu0 %v493
      %v557 = vpop.f32.mrf.mxu0
      %v558 = vadd.f32 %v456, %v557
      %559 = vmatmul.f32.gmra.mxu0 %v496
      %v560 = vpop.f32.mrf.mxu0
      %v561 = vadd.f32 %v456, %v560
      %562 = vmatmul.f32.gmra.mxu0 %v499
      %v563 = vpop.f32.mrf.mxu0
      %v564 = vadd.f32 %v456, %v563
      %565 = vmatmul.f32.gmra.mxu0 %v502
      %v566 = vpop.f32.mrf.mxu0
      %v567 = vadd.f32 %v456, %v566
      %568 = vmatmul.f32.gmra.mxu0 %v505
      %v569 = vpop.f32.mrf.mxu0
      %v570 = vadd.f32 %v456, %v569
      %571 = vdwg.mxu0
      %v572 = vxor.u32 %v525, 2147483648
      %v573 = vxor.u32 %v528, 2147483648
      %v574 = vxor.u32 %v531, 2147483648
      %v575 = vxor.u32 %v534, 2147483648
      %v576 = vxor.u32 %v537, 2147483648
      %v577 = vxor.u32 %v540, 2147483648
      %v578 = vxor.u32 %v543, 2147483648
      %v579 = vxor.u32 %v546, 2147483648
      %v580 = vxor.u32 %v549, 2147483648
      %v581 = vxor.u32 %v552, 2147483648
      %v582 = vxor.u32 %v555, 2147483648
      %v583 = vxor.u32 %v558, 2147483648
      %v584 = vxor.u32 %v561, 2147483648
      %v585 = vxor.u32 %v564, 2147483648
      %v586 = vxor.u32 %v567, 2147483648
      %v587 = vxor.u32 %v570, 2147483648
      %v588 = vmul.f32 %v572, 1.442695
      %v589 = vpow.pop %v588
      %v590 = vmul.f32 %v573, 1.442695
      %v591 = vpow.pop %v590
      %v592 = vmul.f32 %v574, 1.442695
      %v593 = vpow.pop %v592
      %v594 = vmul.f32 %v575, 1.442695
      %v595 = vpow.pop %v594
      %v596 = vmul.f32 %v576, 1.442695
      %v597 = vpow.pop %v596
      %v598 = vmul.f32 %v577, 1.442695
      %v599 = vpow.pop %v598
      %v600 = vmul.f32 %v578, 1.442695
      %v601 = vpow.pop %v600
      %v602 = vmul.f32 %v579, 1.442695
      %v603 = vpow.pop %v602
      %v604 = vmul.f32 %v580, 1.442695
      %v605 = vpow.pop %v604
      %v606 = vmul.f32 %v581, 1.442695
      %v607 = vpow.pop %v606
      %v608 = vmul.f32 %v582, 1.442695
      %v609 = vpow.pop %v608
      %v610 = vmul.f32 %v583, 1.442695
      %v611 = vpow.pop %v610
      %v612 = vmul.f32 %v584, 1.442695
      %v613 = vpow.pop %v612
      %v614 = vmul.f32 %v585, 1.442695
      %v615 = vpow.pop %v614
      %v616 = vmul.f32 %v586, 1.442695
      %v617 = vpow.pop %v616
      %v618 = vmul.f32 %v587, 1.442695
      %v619 = vpow.pop %v618
      %v620 = vadd.f32 %v589, 1.0
      %v621 = vadd.f32 %v591, 1.0
      %v622 = vadd.f32 %v593, 1.0
      %v623 = vadd.f32 %v595, 1.0
      %v624 = vadd.f32 %v597, 1.0
      %v625 = vadd.f32 %v599, 1.0
      %v626 = vadd.f32 %v601, 1.0
      %v627 = vadd.f32 %v603, 1.0
      %v628 = vadd.f32 %v605, 1.0
      %v629 = vadd.f32 %v607, 1.0
      %v630 = vadd.f32 %v609, 1.0
      %v631 = vadd.f32 %v611, 1.0
      %v632 = vadd.f32 %v613, 1.0
      %v633 = vadd.f32 %v615, 1.0
      %v634 = vadd.f32 %v617, 1.0
      %v635 = vadd.f32 %v619, 1.0
      %v636 = vrcp.pop %v620
      %v637 = vmul.f32 %v620, %v636
      %v638 = vsub.f32 1.0, %v637
      %v639 = vmul.f32 %v636, %v638
      %v640 = vadd.f32 %v636, %v639
      %vm641 = vweird.f32 %v620
      %vm642 = vweird.f32 %v636
      %vm643 = vmor %vm641, %vm642
      %v644 = vsel %vm643, %v636, %v640
      %v645 = vand.u32 2147483647, %v620
      %vm646 = vcmp.eq.f32.partialorder %v645, 8.507059e+37
      %v647 = vand.u32 %v620, 2147483648
      %v648 = vor.u32 1.1754944e-38, %v647
      %v649 = vsel %vm646, %v648, %v644
      %v650 = vmul.f32 1.0, %v649
      %v651 = vrcp.pop %v621
      %v652 = vmul.f32 %v621, %v651
      %v653 = vsub.f32 1.0, %v652
      %v654 = vmul.f32 %v651, %v653
      %v655 = vadd.f32 %v651, %v654
      %vm656 = vweird.f32 %v621
      %vm657 = vweird.f32 %v651
      %vm658 = vmor %vm656, %vm657
      %v659 = vsel %vm658, %v651, %v655
      %v660 = vand.u32 2147483647, %v621
      %vm661 = vcmp.eq.f32.partialorder %v660, 8.507059e+37
      %v662 = vand.u32 %v621, 2147483648
      %v663 = vor.u32 1.1754944e-38, %v662
      %v664 = vsel %vm661, %v663, %v659
      %v665 = vmul.f32 1.0, %v664
      %v666 = vrcp.pop %v622
      %v667 = vmul.f32 %v622, %v666
      %v668 = vsub.f32 1.0, %v667
      %v669 = vmul.f32 %v666, %v668
      %v670 = vadd.f32 %v666, %v669
      %vm671 = vweird.f32 %v622
      %vm672 = vweird.f32 %v666
      %vm673 = vmor %vm671, %vm672
      %v674 = vsel %vm673, %v666, %v670
      %v675 = vand.u32 2147483647, %v622
      %vm676 = vcmp.eq.f32.partialorder %v675, 8.507059e+37
      %v677 = vand.u32 %v622, 2147483648
      %v678 = vor.u32 1.1754944e-38, %v677
      %v679 = vsel %vm676, %v678, %v674
      %v680 = vmul.f32 1.0, %v679
      %v681 = vrcp.pop %v623
      %v682 = vmul.f32 %v623, %v681
      %v683 = vsub.f32 1.0, %v682
      %v684 = vmul.f32 %v681, %v683
      %v685 = vadd.f32 %v681, %v684
      %vm686 = vweird.f32 %v623
      %vm687 = vweird.f32 %v681
      %vm688 = vmor %vm686, %vm687
      %v689 = vsel %vm688, %v681, %v685
      %v690 = vand.u32 2147483647, %v623
      %vm691 = vcmp.eq.f32.partialorder %v690, 8.507059e+37
      %v692 = vand.u32 %v623, 2147483648
      %v693 = vor.u32 1.1754944e-38, %v692
      %v694 = vsel %vm691, %v693, %v689
      %v695 = vmul.f32 1.0, %v694
      %v696 = vrcp.pop %v624
      %v697 = vmul.f32 %v624, %v696
      %v698 = vsub.f32 1.0, %v697
      %v699 = vmul.f32 %v696, %v698
      %v700 = vadd.f32 %v696, %v699
      %vm701 = vweird.f32 %v624
      %vm702 = vweird.f32 %v696
      %vm703 = vmor %vm701, %vm702
      %v704 = vsel %vm703, %v696, %v700
      %v705 = vand.u32 2147483647, %v624
      %vm706 = vcmp.eq.f32.partialorder %v705, 8.507059e+37
      %v707 = vand.u32 %v624, 2147483648
      %v708 = vor.u32 1.1754944e-38, %v707
      %v709 = vsel %vm706, %v708, %v704
      %v710 = vmul.f32 1.0, %v709
      %v711 = vrcp.pop %v625
      %v712 = vmul.f32 %v625, %v711
      %v713 = vsub.f32 1.0, %v712
      %v714 = vmul.f32 %v711, %v713
      %v715 = vadd.f32 %v711, %v714
      %vm716 = vweird.f32 %v625
      %vm717 = vweird.f32 %v711
      %vm718 = vmor %vm716, %vm717
      %v719 = vsel %vm718, %v711, %v715
      %v720 = vand.u32 2147483647, %v625
      %vm721 = vcmp.eq.f32.partialorder %v720, 8.507059e+37
      %v722 = vand.u32 %v625, 2147483648
      %v723 = vor.u32 1.1754944e-38, %v722
      %v724 = vsel %vm721, %v723, %v719
      %v725 = vmul.f32 1.0, %v724
      %v726 = vrcp.pop %v626
      %v727 = vmul.f32 %v626, %v726
      %v728 = vsub.f32 1.0, %v727
      %v729 = vmul.f32 %v726, %v728
      %v730 = vadd.f32 %v726, %v729
      %vm731 = vweird.f32 %v626
      %vm732 = vweird.f32 %v726
      %vm733 = vmor %vm731, %vm732
      %v734 = vsel %vm733, %v726, %v730
      %v735 = vand.u32 2147483647, %v626
      %vm736 = vcmp.eq.f32.partialorder %v735, 8.507059e+37
      %v737 = vand.u32 %v626, 2147483648
      %v738 = vor.u32 1.1754944e-38, %v737
      %v739 = vsel %vm736, %v738, %v734
      %v740 = vmul.f32 1.0, %v739
      %v741 = vrcp.pop %v627
      %v742 = vmul.f32 %v627, %v741
      %v743 = vsub.f32 1.0, %v742
      %v744 = vmul.f32 %v741, %v743
      %v745 = vadd.f32 %v741, %v744
      %vm746 = vweird.f32 %v627
      %vm747 = vweird.f32 %v741
      %vm748 = vmor %vm746, %vm747
      %v749 = vsel %vm748, %v741, %v745
      %v750 = vand.u32 2147483647, %v627
      %vm751 = vcmp.eq.f32.partialorder %v750, 8.507059e+37
      %v752 = vand.u32 %v627, 2147483648
      %v753 = vor.u32 1.1754944e-38, %v752
      %v754 = vsel %vm751, %v753, %v749
      %v755 = vmul.f32 1.0, %v754
      %v756 = vrcp.pop %v628
      %v757 = vmul.f32 %v628, %v756
      %v758 = vsub.f32 1.0, %v757
      %v759 = vmul.f32 %v756, %v758
      %v760 = vadd.f32 %v756, %v759
      %vm761 = vweird.f32 %v628
      %vm762 = vweird.f32 %v756
      %vm763 = vmor %vm761, %vm762
      %v764 = vsel %vm763, %v756, %v760
      %v765 = vand.u32 2147483647, %v628
      %vm766 = vcmp.eq.f32.partialorder %v765, 8.507059e+37
      %v767 = vand.u32 %v628, 2147483648
      %v768 = vor.u32 1.1754944e-38, %v767
      %v769 = vsel %vm766, %v768, %v764
      %v770 = vmul.f32 1.0, %v769
      %v771 = vrcp.pop %v629
      %v772 = vmul.f32 %v629, %v771
      %v773 = vsub.f32 1.0, %v772
      %v774 = vmul.f32 %v771, %v773
      %v775 = vadd.f32 %v771, %v774
      %vm776 = vweird.f32 %v629
      %vm777 = vweird.f32 %v771
      %vm778 = vmor %vm776, %vm777
      %v779 = vsel %vm778, %v771, %v775
      %v780 = vand.u32 2147483647, %v629
      %vm781 = vcmp.eq.f32.partialorder %v780, 8.507059e+37
      %v782 = vand.u32 %v629, 2147483648
      %v783 = vor.u32 1.1754944e-38, %v782
      %v784 = vsel %vm781, %v783, %v779
      %v785 = vmul.f32 1.0, %v784
      %v786 = vrcp.pop %v630
      %v787 = vmul.f32 %v630, %v786
      %v788 = vsub.f32 1.0, %v787
      %v789 = vmul.f32 %v786, %v788
      %v790 = vadd.f32 %v786, %v789
      %vm791 = vweird.f32 %v630
      %vm792 = vweird.f32 %v786
      %vm793 = vmor %vm791, %vm792
      %v794 = vsel %vm793, %v786, %v790
      %v795 = vand.u32 2147483647, %v630
      %vm796 = vcmp.eq.f32.partialorder %v795, 8.507059e+37
      %v797 = vand.u32 %v630, 2147483648
      %v798 = vor.u32 1.1754944e-38, %v797
      %v799 = vsel %vm796, %v798, %v794
      %v800 = vmul.f32 1.0, %v799
      %v801 = vrcp.pop %v631
      %v802 = vmul.f32 %v631, %v801
      %v803 = vsub.f32 1.0, %v802
      %v804 = vmul.f32 %v801, %v803
      %v805 = vadd.f32 %v801, %v804
      %vm806 = vweird.f32 %v631
      %vm807 = vweird.f32 %v801
      %vm808 = vmor %vm806, %vm807
      %v809 = vsel %vm808, %v801, %v805
      %v810 = vand.u32 2147483647, %v631
      %vm811 = vcmp.eq.f32.partialorder %v810, 8.507059e+37
      %v812 = vand.u32 %v631, 2147483648
      %v813 = vor.u32 1.1754944e-38, %v812
      %v814 = vsel %vm811, %v813, %v809
      %v815 = vmul.f32 1.0, %v814
      %v816 = vrcp.pop %v632
      %v817 = vmul.f32 %v632, %v816
      %v818 = vsub.f32 1.0, %v817
      %v819 = vmul.f32 %v816, %v818
      %v820 = vadd.f32 %v816, %v819
      %vm821 = vweird.f32 %v632
      %vm822 = vweird.f32 %v816
      %vm823 = vmor %vm821, %vm822
      %v824 = vsel %vm823, %v816, %v820
      %v825 = vand.u32 2147483647, %v632
      %vm826 = vcmp.eq.f32.partialorder %v825, 8.507059e+37
      %v827 = vand.u32 %v632, 2147483648
      %v828 = vor.u32 1.1754944e-38, %v827
      %v829 = vsel %vm826, %v828, %v824
      %v830 = vmul.f32 1.0, %v829
      %v831 = vrcp.pop %v633
      %v832 = vmul.f32 %v633, %v831
      %v833 = vsub.f32 1.0, %v832
      %v834 = vmul.f32 %v831, %v833
      %v835 = vadd.f32 %v831, %v834
      %vm836 = vweird.f32 %v633
      %vm837 = vweird.f32 %v831
      %vm838 = vmor %vm836, %vm837
      %v839 = vsel %vm838, %v831, %v835
      %v840 = vand.u32 2147483647, %v633
      %vm841 = vcmp.eq.f32.partialorder %v840, 8.507059e+37
      %v842 = vand.u32 %v633, 2147483648
      %v843 = vor.u32 1.1754944e-38, %v842
      %v844 = vsel %vm841, %v843, %v839
      %v845 = vmul.f32 1.0, %v844
      %v846 = vrcp.pop %v634
      %v847 = vmul.f32 %v634, %v846
      %v848 = vsub.f32 1.0, %v847
      %v849 = vmul.f32 %v846, %v848
      %v850 = vadd.f32 %v846, %v849
      %vm851 = vweird.f32 %v634
      %vm852 = vweird.f32 %v846
      %vm853 = vmor %vm851, %vm852
      %v854 = vsel %vm853, %v846, %v850
      %v855 = vand.u32 2147483647, %v634
      %vm856 = vcmp.eq.f32.partialorder %v855, 8.507059e+37
      %v857 = vand.u32 %v634, 2147483648
      %v858 = vor.u32 1.1754944e-38, %v857
      %v859 = vsel %vm856, %v858, %v854
      %v860 = vmul.f32 1.0, %v859
      %v861 = vrcp.pop %v635
      %v862 = vmul.f32 %v635, %v861
      %v863 = vsub.f32 1.0, %v862
      %v864 = vmul.f32 %v861, %v863
      %v865 = vadd.f32 %v861, %v864
      %vm866 = vweird.f32 %v635
      %vm867 = vweird.f32 %v861
      %vm868 = vmor %vm866, %vm867
      %v869 = vsel %vm868, %v861, %v865
      %v870 = vand.u32 2147483647, %v635
      %vm871 = vcmp.eq.f32.partialorder %v870, 8.507059e+37
      %v872 = vand.u32 %v635, 2147483648
      %v873 = vor.u32 1.1754944e-38, %v872
      %v874 = vsel %vm871, %v873, %v869
      %v875 = vmul.f32 1.0, %v874
      %v876 = vmul.f32 %v525, %v650
      %v877 = vmul.f32 %v528, %v665
      %v878 = vmul.f32 %v531, %v680
      %v879 = vmul.f32 %v534, %v695
      %v880 = vmul.f32 %v537, %v710
      %v881 = vmul.f32 %v540, %v725
      %v882 = vmul.f32 %v543, %v740
      %v883 = vmul.f32 %v546, %v755
      %v884 = vmul.f32 %v549, %v770
      %v885 = vmul.f32 %v552, %v785
      %v886 = vmul.f32 %v555, %v800
      %v887 = vmul.f32 %v558, %v815
      %v888 = vmul.f32 %v561, %v830
      %v889 = vmul.f32 %v564, %v845
      %v890 = vmul.f32 %v567, %v860
      %v891 = vmul.f32 %v570, %v875
      %v892 = vld [vmem:[%s5] sm:$0xff]
      %v893 = vld [vmem:[%s5 + $0x8] sm:$0xff]
      %v894 = vld [vmem:[%s5 + $0x10] sm:$0xff]
      %v895 = vld [vmem:[%s5 + $0x18] sm:$0xff]
      %v896 = vld [vmem:[%s6] sm:$0x1]
      %v898 = vperm.slane %v896, 0
      %v901 = vsel %vm458, %v876, 0
      %v904 = vsel %vm458, %v877, 0
      %v907 = vsel %vm458, %v878, 0
      %v910 = vsel %vm458, %v879, 0
      %v913 = vsel %vm458, %v880, 0
      %v916 = vsel %vm458, %v881, 0
      %v919 = vsel %vm458, %v882, 0
      %v922 = vsel %vm458, %v883, 0
      %v925 = vsel %vm458, %v884, 0
      %v928 = vsel %vm458, %v885, 0
      %v931 = vsel %vm458, %v886, 0
      %v934 = vsel %vm458, %v887, 0
      %v937 = vsel %vm458, %v888, 0
      %v940 = vsel %vm458, %v889, 0
      %v943 = vsel %vm458, %v890, 0
      %v946 = vsel %vm458, %v891, 0
      %948 = vmatpush.msra.mxu0 0.0
      %949 = vmatpush.msra.mxu0 0.0
      %950 = vmatpush.msra.mxu0 0.0
      %951 = vmatpush.msra.mxu0 0.0
      %952 = vmatpush.msra.mxu0 0.0
      %953 = vmatpush.msra.mxu0 0.0
      %954 = vmatpush.msra.mxu0 0.0
      %955 = vmatpush.msra.mxu0 0.0
      %956 = vmatpush.msra.mxu0 0.0
      %957 = vmatpush.msra.mxu0 0.0
      %958 = vmatpush.msra.mxu0 0.0
      %959 = vmatpush.msra.mxu0 0.0
      %960 = vmatpush.msra.mxu0 %v895
      %961 = vmatpush.msra.mxu0 %v894
      %962 = vmatpush.msra.mxu0 %v893
      %963 = vmatpush.msra.mxu0 %v892
      %964 = vmatmul.f32.gmra.mxu0 %v901
      %v965 = vpop.f32.mrf.mxu0
      %v966 = vadd.f32 %v898, %v965
      %967 = vmatmul.f32.gmra.mxu0 %v904
      %v968 = vpop.f32.mrf.mxu0
      %v969 = vadd.f32 %v898, %v968
      %970 = vmatmul.f32.gmra.mxu0 %v907
      %v971 = vpop.f32.mrf.mxu0
      %v972 = vadd.f32 %v898, %v971
      %973 = vmatmul.f32.gmra.mxu0 %v910
      %v974 = vpop.f32.mrf.mxu0
      %v975 = vadd.f32 %v898, %v974
      %976 = vmatmul.f32.gmra.mxu0 %v913
      %v977 = vpop.f32.mrf.mxu0
      %v978 = vadd.f32 %v898, %v977
      %979 = vmatmul.f32.gmra.mxu0 %v916
      %v980 = vpop.f32.mrf.mxu0
      %v981 = vadd.f32 %v898, %v980
      %982 = vmatmul.f32.gmra.mxu0 %v919
      %v983 = vpop.f32.mrf.mxu0
      %v984 = vadd.f32 %v898, %v983
      %985 = vmatmul.f32.gmra.mxu0 %v922
      %v986 = vpop.f32.mrf.mxu0
      %v987 = vadd.f32 %v898, %v986
      %988 = vmatmul.f32.gmra.mxu0 %v925
      %v989 = vpop.f32.mrf.mxu0
      %v990 = vadd.f32 %v898, %v989
      %991 = vmatmul.f32.gmra.mxu0 %v928
      %v992 = vpop.f32.mrf.mxu0
      %v993 = vadd.f32 %v898, %v992
      %994 = vmatmul.f32.gmra.mxu0 %v931
      %v995 = vpop.f32.mrf.mxu0
      %v996 = vadd.f32 %v898, %v995
      %997 = vmatmul.f32.gmra.mxu0 %v934
      %v998 = vpop.f32.mrf.mxu0
      %v999 = vadd.f32 %v898, %v998
      %1000 = vmatmul.f32.gmra.mxu0 %v937
      %v1001 = vpop.f32.mrf.mxu0
      %v1002 = vadd.f32 %v898, %v1001
      %1003 = vmatmul.f32.gmra.mxu0 %v940
      %v1004 = vpop.f32.mrf.mxu0
      %v1005 = vadd.f32 %v898, %v1004
      %1006 = vmatmul.f32.gmra.mxu0 %v943
      %v1007 = vpop.f32.mrf.mxu0
      %v1008 = vadd.f32 %v898, %v1007
      %1009 = vmatmul.f32.gmra.mxu0 %v946
      %v1010 = vpop.f32.mrf.mxu0
      %v1011 = vadd.f32 %v898, %v1010
      %1012 = vdwg.mxu0
      %v1013 = vld [vmem:[%s420] sm:$0xf]
      %v1014 = vld [vmem:[%s420 + $0x4] sm:$0xf]
      %v1015 = vld [vmem:[%s420 + $0x8] sm:$0xf]
      %v1016 = vld [vmem:[%s420 + $0xc] sm:$0xf]
      %v1017 = vld [vmem:[%s420 + $0x10] sm:$0xf]
      %v1018 = vld [vmem:[%s420 + $0x14] sm:$0xf]
      %v1019 = vld [vmem:[%s420 + $0x18] sm:$0xf]
      %v1020 = vld [vmem:[%s420 + $0x1c] sm:$0xf]
      %v1021 = vld [vmem:[%s420 + $0x20] sm:$0xf]
      %v1022 = vld [vmem:[%s420 + $0x24] sm:$0xf]
      %v1023 = vld [vmem:[%s420 + $0x28] sm:$0xf]
      %v1024 = vld [vmem:[%s420 + $0x2c] sm:$0xf]
      %v1025 = vld [vmem:[%s420 + $0x30] sm:$0xf]
      %v1026 = vld [vmem:[%s420 + $0x34] sm:$0xf]
      %v1027 = vld [vmem:[%s420 + $0x38] sm:$0xf]
      %v1028 = vld [vmem:[%s420 + $0x3c] sm:$0xf]
      %v1029 = vunpack.c.l.bf16 %v1013
      %v1030 = vunpack.c.l.bf16 %v1014
      %v1031 = vunpack.c.l.bf16 %v1015
      %v1032 = vunpack.c.l.bf16 %v1016
      %v1033 = vunpack.c.l.bf16 %v1017
      %v1034 = vunpack.c.l.bf16 %v1018
      %v1035 = vunpack.c.l.bf16 %v1019
      %v1036 = vunpack.c.l.bf16 %v1020
      %v1037 = vunpack.c.l.bf16 %v1021
      %v1038 = vunpack.c.l.bf16 %v1022
      %v1039 = vunpack.c.l.bf16 %v1023
      %v1040 = vunpack.c.l.bf16 %v1024
      %v1041 = vunpack.c.l.bf16 %v1025
      %v1042 = vunpack.c.l.bf16 %v1026
      %v1043 = vunpack.c.l.bf16 %v1027
      %v1044 = vunpack.c.l.bf16 %v1028
      %v1045 = vld [vmem:[%s7] sm:$0xff]
      %v1046 = vld [vmem:[%s7 + $0x8] sm:$0xff]
      %v1047 = vld [vmem:[%s7 + $0x10] sm:$0xff]
      %v1048 = vld [vmem:[%s7 + $0x18] sm:$0xff]
      %v1049 = vld [vmem:[%s7 + $0x20] sm:$0xff]
      %v1050 = vld [vmem:[%s7 + $0x28] sm:$0xff]
      %v1051 = vld [vmem:[%s7 + $0x30] sm:$0xff]
      %v1052 = vld [vmem:[%s7 + $0x38] sm:$0xff]
      %v1053 = vld [vmem:[%s7 + $0x40] sm:$0xff]
      %v1054 = vld [vmem:[%s7 + $0x48] sm:$0xff]
      %v1055 = vld [vmem:[%s7 + $0x50] sm:$0xff]
      %v1056 = vld [vmem:[%s7 + $0x58] sm:$0xff]
      %vm1057 = vcmask 785408
      %v1059 = vsel %vm1057, %v1029, 0
      %v1062 = vsel %vm1057, %v1030, 0
      %v1065 = vsel %vm1057, %v1031, 0
      %v1068 = vsel %vm1057, %v1032, 0
      %v1071 = vsel %vm1057, %v1033, 0
      %v1074 = vsel %vm1057, %v1034, 0
      %v1077 = vsel %vm1057, %v1035, 0
      %v1080 = vsel %vm1057, %v1036, 0
      %v1083 = vsel %vm1057, %v1037, 0
      %v1086 = vsel %vm1057, %v1038, 0
      %v1089 = vsel %vm1057, %v1039, 0
      %v1092 = vsel %vm1057, %v1040, 0
      %v1095 = vsel %vm1057, %v1041, 0
      %v1098 = vsel %vm1057, %v1042, 0
      %v1101 = vsel %vm1057, %v1043, 0
      %v1104 = vsel %vm1057, %v1044, 0
      %1106 = vmatpush.msra.mxu0 0.0
      %1107 = vmatpush.msra.mxu0 0.0
      %1108 = vmatpush.msra.mxu0 0.0
      %1109 = vmatpush.msra.mxu0 0.0
      %1110 = vmatpush.msra.mxu0 %v1056
      %1111 = vmatpush.msra.mxu0 %v1055
      %1112 = vmatpush.msra.mxu0 %v1054
      %1113 = vmatpush.msra.mxu0 %v1053
      %1114 = vmatpush.msra.mxu0 %v1052
      %1115 = vmatpush.msra.mxu0 %v1051
      %1116 = vmatpush.msra.mxu0 %v1050
      %1117 = vmatpush.msra.mxu0 %v1049
      %1118 = vmatpush.msra.mxu0 %v1048
      %1119 = vmatpush.msra.mxu0 %v1047
      %1120 = vmatpush.msra.mxu0 %v1046
      %1121 = vmatpush.msra.mxu0 %v1045
      %1122 = vmatmul.f32.gmra.mxu0 %v1059
      %v1123 = vpop.f32.mrf.mxu0
      %v1124 = vadd.f32 0.0, %v1123
      %1125 = vmatmul.f32.gmra.mxu0 %v1062
      %v1126 = vpop.f32.mrf.mxu0
      %v1127 = vadd.f32 0.0, %v1126
      %1128 = vmatmul.f32.gmra.mxu0 %v1065
      %v1129 = vpop.f32.mrf.mxu0
      %v1130 = vadd.f32 0.0, %v1129
      %1131 = vmatmul.f32.gmra.mxu0 %v1068
      %v1132 = vpop.f32.mrf.mxu0
      %v1133 = vadd.f32 0.0, %v1132
      %1134 = vmatmul.f32.gmra.mxu0 %v1071
      %v1135 = vpop.f32.mrf.mxu0
      %v1136 = vadd.f32 0.0, %v1135
      %1137 = vmatmul.f32.gmra.mxu0 %v1074
      %v1138 = vpop.f32.mrf.mxu0
      %v1139 = vadd.f32 0.0, %v1138
      %1140 = vmatmul.f32.gmra.mxu0 %v1077
      %v1141 = vpop.f32.mrf.mxu0
      %v1142 = vadd.f32 0.0, %v1141
      %1143 = vmatmul.f32.gmra.mxu0 %v1080
      %v1144 = vpop.f32.mrf.mxu0
      %v1145 = vadd.f32 0.0, %v1144
      %1146 = vmatmul.f32.gmra.mxu0 %v1083
      %v1147 = vpop.f32.mrf.mxu0
      %v1148 = vadd.f32 0.0, %v1147
      %1149 = vmatmul.f32.gmra.mxu0 %v1086
      %v1150 = vpop.f32.mrf.mxu0
      %v1151 = vadd.f32 0.0, %v1150
      %1152 = vmatmul.f32.gmra.mxu0 %v1089
      %v1153 = vpop.f32.mrf.mxu0
      %v1154 = vadd.f32 0.0, %v1153
      %1155 = vmatmul.f32.gmra.mxu0 %v1092
      %v1156 = vpop.f32.mrf.mxu0
      %v1157 = vadd.f32 0.0, %v1156
      %1158 = vmatmul.f32.gmra.mxu0 %v1095
      %v1159 = vpop.f32.mrf.mxu0
      %v1160 = vadd.f32 0.0, %v1159
      %1161 = vmatmul.f32.gmra.mxu0 %v1098
      %v1162 = vpop.f32.mrf.mxu0
      %v1163 = vadd.f32 0.0, %v1162
      %1164 = vmatmul.f32.gmra.mxu0 %v1101
      %v1165 = vpop.f32.mrf.mxu0
      %v1166 = vadd.f32 0.0, %v1165
      %1167 = vmatmul.f32.gmra.mxu0 %v1104
      %v1168 = vpop.f32.mrf.mxu0
      %v1169 = vadd.f32 0.0, %v1168
      %1170 = vdwg.mxu0
      %v1171 = vld [vmem:[%s8] sm:$0xff]
      %v1172 = vld [vmem:[%s8 + $0x8] sm:$0xff]
      %v1173 = vld [vmem:[%s8 + $0x10] sm:$0xff]
      %v1174 = vld [vmem:[%s8 + $0x18] sm:$0xff]
      %v1175 = vld [vmem:[%s8 + $0x20] sm:$0xff]
      %v1176 = vld [vmem:[%s8 + $0x28] sm:$0xff]
      %v1177 = vld [vmem:[%s8 + $0x30] sm:$0xff]
      %v1178 = vld [vmem:[%s8 + $0x38] sm:$0xff]
      %v1179 = vld [vmem:[%s8 + $0x40] sm:$0xff]
      %v1180 = vld [vmem:[%s8 + $0x48] sm:$0xff]
      %v1181 = vld [vmem:[%s8 + $0x50] sm:$0xff]
      %v1182 = vld [vmem:[%s8 + $0x58] sm:$0xff]
      %1183 = vmatpush.msra.mxu0 0.0
      %1184 = vmatpush.msra.mxu0 0.0
      %1185 = vmatpush.msra.mxu0 0.0
      %1186 = vmatpush.msra.mxu0 0.0
      %1187 = vmatpush.msra.mxu0 %v1182
      %1188 = vmatpush.msra.mxu0 %v1181
      %1189 = vmatpush.msra.mxu0 %v1180
      %1190 = vmatpush.msra.mxu0 %v1179
      %1191 = vmatpush.msra.mxu0 %v1178
      %1192 = vmatpush.msra.mxu0 %v1177
      %1193 = vmatpush.msra.mxu0 %v1176
      %1194 = vmatpush.msra.mxu0 %v1175
      %1195 = vmatpush.msra.mxu0 %v1174
      %1196 = vmatpush.msra.mxu0 %v1173
      %1197 = vmatpush.msra.mxu0 %v1172
      %1198 = vmatpush.msra.mxu0 %v1171
      %1199 = vmatmul.f32.gmra.mxu0 %v1059
      %v1200 = vpop.f32.mrf.mxu0
      %v1201 = vadd.f32 0.0, %v1200
      %1202 = vmatmul.f32.gmra.mxu0 %v1062
      %v1203 = vpop.f32.mrf.mxu0
      %v1204 = vadd.f32 0.0, %v1203
      %1205 = vmatmul.f32.gmra.mxu0 %v1065
      %v1206 = vpop.f32.mrf.mxu0
      %v1207 = vadd.f32 0.0, %v1206
      %1208 = vmatmul.f32.gmra.mxu0 %v1068
      %v1209 = vpop.f32.mrf.mxu0
      %v1210 = vadd.f32 0.0, %v1209
      %1211 = vmatmul.f32.gmra.mxu0 %v1071
      %v1212 = vpop.f32.mrf.mxu0
      %v1213 = vadd.f32 0.0, %v1212
      %1214 = vmatmul.f32.gmra.mxu0 %v1074
      %v1215 = vpop.f32.mrf.mxu0
      %v1216 = vadd.f32 0.0, %v1215
      %1217 = vmatmul.f32.gmra.mxu0 %v1077
      %v1218 = vpop.f32.mrf.mxu0
      %v1219 = vadd.f32 0.0, %v1218
      %1220 = vmatmul.f32.gmra.mxu0 %v1080
      %v1221 = vpop.f32.mrf.mxu0
      %v1222 = vadd.f32 0.0, %v1221
      %1223 = vmatmul.f32.gmra.mxu0 %v1083
      %v1224 = vpop.f32.mrf.mxu0
      %v1225 = vadd.f32 0.0, %v1224
      %1226 = vmatmul.f32.gmra.mxu0 %v1086
      %v1227 = vpop.f32.mrf.mxu0
      %v1228 = vadd.f32 0.0, %v1227
      %1229 = vmatmul.f32.gmra.mxu0 %v1089
      %v1230 = vpop.f32.mrf.mxu0
      %v1231 = vadd.f32 0.0, %v1230
      %1232 = vmatmul.f32.gmra.mxu0 %v1092
      %v1233 = vpop.f32.mrf.mxu0
      %v1234 = vadd.f32 0.0, %v1233
      %1235 = vmatmul.f32.gmra.mxu0 %v1095
      %v1236 = vpop.f32.mrf.mxu0
      %v1237 = vadd.f32 0.0, %v1236
      %1238 = vmatmul.f32.gmra.mxu0 %v1098
      %v1239 = vpop.f32.mrf.mxu0
      %v1240 = vadd.f32 0.0, %v1239
      %1241 = vmatmul.f32.gmra.mxu0 %v1101
      %v1242 = vpop.f32.mrf.mxu0
      %v1243 = vadd.f32 0.0, %v1242
      %1244 = vmatmul.f32.gmra.mxu0 %v1104
      %v1245 = vpop.f32.mrf.mxu0
      %v1246 = vadd.f32 0.0, %v1245
      %1247 = vdwg.mxu0
      %v1248 = vld [vmem:[%s426] sm:$0xff]
      %v1249 = vld [vmem:[%s426 + $0x8] sm:$0xff]
      %v1250 = vld [vmem:[%s426 + $0x10] sm:$0xff]
      %v1251 = vld [vmem:[%s426 + $0x18] sm:$0xff]
      %v1252 = vld [vmem:[%s426 + $0x20] sm:$0xff]
      %v1253 = vld [vmem:[%s426 + $0x28] sm:$0xff]
      %v1254 = vld [vmem:[%s426 + $0x30] sm:$0xff]
      %v1255 = vld [vmem:[%s426 + $0x38] sm:$0xff]
      %v1256 = vld [vmem:[%s426 + $0x40] sm:$0xff]
      %v1257 = vld [vmem:[%s426 + $0x48] sm:$0xff]
      %v1258 = vld [vmem:[%s426 + $0x50] sm:$0xff]
      %v1259 = vld [vmem:[%s426 + $0x58] sm:$0xff]
      %v1260 = vld [vmem:[%s426 + $0x60] sm:$0xff]
      %v1261 = vld [vmem:[%s426 + $0x68] sm:$0xff]
      %v1262 = vld [vmem:[%s426 + $0x70] sm:$0xff]
      %v1263 = vld [vmem:[%s426 + $0x78] sm:$0xff]
      %v1264 = vld [vmem:[%s9] sm:$0x7]
      %vm1265 = vcmask 23552
      %v1267 = vsel %vm1265, %v1248, 0
      %v1270 = vsel %vm1265, %v1249, 0
      %v1273 = vsel %vm1265, %v1250, 0
      %v1276 = vsel %vm1265, %v1251, 0
      %v1279 = vsel %vm1265, %v1252, 0
      %v1282 = vsel %vm1265, %v1253, 0
      %v1285 = vsel %vm1265, %v1254, 0
      %v1288 = vsel %vm1265, %v1255, 0
      %v1291 = vsel %vm1265, %v1256, 0
      %v1294 = vsel %vm1265, %v1257, 0
      %v1297 = vsel %vm1265, %v1258, 0
      %v1300 = vsel %vm1265, %v1259, 0
      %v1303 = vsel %vm1265, %v1260, 0
      %v1306 = vsel %vm1265, %v1261, 0
      %v1309 = vsel %vm1265, %v1262, 0
      %v1312 = vsel %vm1265, %v1263, 0
      %vm1314 = vcmask 1042432
      %v1316 = vsel %vm1314, %v1264, 0
      %1318 = vmatpush.msra.mxu0 0.0
      %1319 = vmatpush.msra.mxu0 0.0
      %1320 = vmatpush.msra.mxu0 0.0
      %1321 = vmatpush.msra.mxu0 0.0
      %1322 = vmatpush.msra.mxu0 0.0
      %1323 = vmatpush.msra.mxu0 0.0
      %1324 = vmatpush.msra.mxu0 0.0
      %1325 = vmatpush.msra.mxu0 0.0
      %1326 = vmatpush.msra.mxu0 0.0
      %1327 = vmatpush.msra.mxu0 0.0
      %1328 = vmatpush.msra.mxu0 0.0
      %1329 = vmatpush.msra.mxu0 0.0
      %1330 = vmatpush.msra.mxu0 0.0
      %1331 = vmatpush.msra.mxu0 0.0
      %1332 = vmatpush.msra.mxu0 0.0
      %1333 = vmatpush.msra.mxu0 %v1316
      %1334 = vmatmul.f32.gmra.mxu0 %v1267
      %v1335 = vpop.f32.mrf.mxu0
      %v1336 = vadd.f32 0.0, %v1335
      %1337 = vmatmul.f32.gmra.mxu0 %v1270
      %v1338 = vpop.f32.mrf.mxu0
      %v1339 = vadd.f32 0.0, %v1338
      %1340 = vmatmul.f32.gmra.mxu0 %v1273
      %v1341 = vpop.f32.mrf.mxu0
      %v1342 = vadd.f32 0.0, %v1341
      %1343 = vmatmul.f32.gmra.mxu0 %v1276
      %v1344 = vpop.f32.mrf.mxu0
      %v1345 = vadd.f32 0.0, %v1344
      %1346 = vmatmul.f32.gmra.mxu0 %v1279
      %v1347 = vpop.f32.mrf.mxu0
      %v1348 = vadd.f32 0.0, %v1347
      %1349 = vmatmul.f32.gmra.mxu0 %v1282
      %v1350 = vpop.f32.mrf.mxu0
      %v1351 = vadd.f32 0.0, %v1350
      %1352 = vmatmul.f32.gmra.mxu0 %v1285
      %v1353 = vpop.f32.mrf.mxu0
      %v1354 = vadd.f32 0.0, %v1353
      %1355 = vmatmul.f32.gmra.mxu0 %v1288
      %v1356 = vpop.f32.mrf.mxu0
      %v1357 = vadd.f32 0.0, %v1356
      %1358 = vmatmul.f32.gmra.mxu0 %v1291
      %v1359 = vpop.f32.mrf.mxu0
      %v1360 = vadd.f32 0.0, %v1359
      %1361 = vmatmul.f32.gmra.mxu0 %v1294
      %v1362 = vpop.f32.mrf.mxu0
      %v1363 = vadd.f32 0.0, %v1362
      %1364 = vmatmul.f32.gmra.mxu0 %v1297
      %v1365 = vpop.f32.mrf.mxu0
      %v1366 = vadd.f32 0.0, %v1365
      %1367 = vmatmul.f32.gmra.mxu0 %v1300
      %v1368 = vpop.f32.mrf.mxu0
      %v1369 = vadd.f32 0.0, %v1368
      %1370 = vmatmul.f32.gmra.mxu0 %v1303
      %v1371 = vpop.f32.mrf.mxu0
      %v1372 = vadd.f32 0.0, %v1371
      %1373 = vmatmul.f32.gmra.mxu0 %v1306
      %v1374 = vpop.f32.mrf.mxu0
      %v1375 = vadd.f32 0.0, %v1374
      %1376 = vmatmul.f32.gmra.mxu0 %v1309
      %v1377 = vpop.f32.mrf.mxu0
      %v1378 = vadd.f32 0.0, %v1377
      %1379 = vmatmul.f32.gmra.mxu0 %v1312
      %v1380 = vpop.f32.mrf.mxu0
      %v1381 = vadd.f32 0.0, %v1380
      %1382 = vdwg.mxu0
      %v1383 = vld [vmem:[%s10] sm:$0x7]
      %v1385 = vsel %vm1314, %v1383, 0
      %1387 = vmatpush.msra.mxu0 0.0
      %1388 = vmatpush.msra.mxu0 0.0
      %1389 = vmatpush.msra.mxu0 0.0
      %1390 = vmatpush.msra.mxu0 0.0
      %1391 = vmatpush.msra.mxu0 0.0
      %1392 = vmatpush.msra.mxu0 0.0
      %1393 = vmatpush.msra.mxu0 0.0
      %1394 = vmatpush.msra.mxu0 0.0
      %1395 = vmatpush.msra.mxu0 0.0
      %1396 = vmatpush.msra.mxu0 0.0
      %1397 = vmatpush.msra.mxu0 0.0
      %1398 = vmatpush.msra.mxu0 0.0
      %1399 = vmatpush.msra.mxu0 0.0
      %1400 = vmatpush.msra.mxu0 0.0
      %1401 = vmatpush.msra.mxu0 0.0
      %1402 = vmatpush.msra.mxu0 %v1385
      %1403 = vmatmul.f32.gmra.mxu0 %v1267
      %v1404 = vpop.f32.mrf.mxu0
      %v1405 = vadd.f32 0.0, %v1404
      %1406 = vmatmul.f32.gmra.mxu0 %v1270
      %v1407 = vpop.f32.mrf.mxu0
      %v1408 = vadd.f32 0.0, %v1407
      %1409 = vmatmul.f32.gmra.mxu0 %v1273
      %v1410 = vpop.f32.mrf.mxu0
      %v1411 = vadd.f32 0.0, %v1410
      %1412 = vmatmul.f32.gmra.mxu0 %v1276
      %v1413 = vpop.f32.mrf.mxu0
      %v1414 = vadd.f32 0.0, %v1413
      %1415 = vmatmul.f32.gmra.mxu0 %v1279
      %v1416 = vpop.f32.mrf.mxu0
      %v1417 = vadd.f32 0.0, %v1416
      %1418 = vmatmul.f32.gmra.mxu0 %v1282
      %v1419 = vpop.f32.mrf.mxu0
      %v1420 = vadd.f32 0.0, %v1419
      %1421 = vmatmul.f32.gmra.mxu0 %v1285
      %v1422 = vpop.f32.mrf.mxu0
      %v1423 = vadd.f32 0.0, %v1422
      %1424 = vmatmul.f32.gmra.mxu0 %v1288
      %v1425 = vpop.f32.mrf.mxu0
      %v1426 = vadd.f32 0.0, %v1425
      %1427 = vmatmul.f32.gmra.mxu0 %v1291
      %v1428 = vpop.f32.mrf.mxu0
      %v1429 = vadd.f32 0.0, %v1428
      %1430 = vmatmul.f32.gmra.mxu0 %v1294
      %v1431 = vpop.f32.mrf.mxu0
      %v1432 = vadd.f32 0.0, %v1431
      %1433 = vmatmul.f32.gmra.mxu0 %v1297
      %v1434 = vpop.f32.mrf.mxu0
      %v1435 = vadd.f32 0.0, %v1434
      %1436 = vmatmul.f32.gmra.mxu0 %v1300
      %v1437 = vpop.f32.mrf.mxu0
      %v1438 = vadd.f32 0.0, %v1437
      %1439 = vmatmul.f32.gmra.mxu0 %v1303
      %v1440 = vpop.f32.mrf.mxu0
      %v1441 = vadd.f32 0.0, %v1440
      %1442 = vmatmul.f32.gmra.mxu0 %v1306
      %v1443 = vpop.f32.mrf.mxu0
      %v1444 = vadd.f32 0.0, %v1443
      %1445 = vmatmul.f32.gmra.mxu0 %v1309
      %v1446 = vpop.f32.mrf.mxu0
      %v1447 = vadd.f32 0.0, %v1446
      %1448 = vmatmul.f32.gmra.mxu0 %v1312
      %v1449 = vpop.f32.mrf.mxu0
      %v1450 = vadd.f32 0.0, %v1449
      %1451 = vdwg.mxu0
      %v1452 = vmul.f32 %v1124, %v1405
      %v1453 = vmul.f32 %v1127, %v1408
      %v1454 = vmul.f32 %v1130, %v1411
      %v1455 = vmul.f32 %v1133, %v1414
      %v1456 = vmul.f32 %v1136, %v1417
      %v1457 = vmul.f32 %v1139, %v1420
      %v1458 = vmul.f32 %v1142, %v1423
      %v1459 = vmul.f32 %v1145, %v1426
      %v1460 = vmul.f32 %v1148, %v1429
      %v1461 = vmul.f32 %v1151, %v1432
      %v1462 = vmul.f32 %v1154, %v1435
      %v1463 = vmul.f32 %v1157, %v1438
      %v1464 = vmul.f32 %v1160, %v1441
      %v1465 = vmul.f32 %v1163, %v1444
      %v1466 = vmul.f32 %v1166, %v1447
      %v1467 = vmul.f32 %v1169, %v1450
      %v1468 = vadd.f32 %v966, %v1452
      %v1469 = vadd.f32 %v969, %v1453
      %v1470 = vadd.f32 %v972, %v1454
      %v1471 = vadd.f32 %v975, %v1455
      %v1472 = vadd.f32 %v978, %v1456
      %v1473 = vadd.f32 %v981, %v1457
      %v1474 = vadd.f32 %v984, %v1458
      %v1475 = vadd.f32 %v987, %v1459
      %v1476 = vadd.f32 %v990, %v1460
      %v1477 = vadd.f32 %v993, %v1461
      %v1478 = vadd.f32 %v996, %v1462
      %v1479 = vadd.f32 %v999, %v1463
      %v1480 = vadd.f32 %v1002, %v1464
      %v1481 = vadd.f32 %v1005, %v1465
      %v1482 = vadd.f32 %v1008, %v1466
      %v1483 = vadd.f32 %v1011, %v1467
      %v1484 = vmul.f32 %v1336, %v1201
      %v1485 = vmul.f32 %v1339, %v1204
      %v1486 = vmul.f32 %v1342, %v1207
      %v1487 = vmul.f32 %v1345, %v1210
      %v1488 = vmul.f32 %v1348, %v1213
      %v1489 = vmul.f32 %v1351, %v1216
      %v1490 = vmul.f32 %v1354, %v1219
      %v1491 = vmul.f32 %v1357, %v1222
      %v1492 = vmul.f32 %v1360, %v1225
      %v1493 = vmul.f32 %v1363, %v1228
      %v1494 = vmul.f32 %v1366, %v1231
      %v1495 = vmul.f32 %v1369, %v1234
      %v1496 = vmul.f32 %v1372, %v1237
      %v1497 = vmul.f32 %v1375, %v1240
      %v1498 = vmul.f32 %v1378, %v1243
      %v1499 = vmul.f32 %v1381, %v1246
      %v1500 = vadd.f32 %v1468, %v1484
      %v1501 = vadd.f32 %v1469, %v1485
      %v1502 = vadd.f32 %v1470, %v1486
      %v1503 = vadd.f32 %v1471, %v1487
      %v1504 = vadd.f32 %v1472, %v1488
      %v1505 = vadd.f32 %v1473, %v1489
      %v1506 = vadd.f32 %v1474, %v1490
      %v1507 = vadd.f32 %v1475, %v1491
      %v1508 = vadd.f32 %v1476, %v1492
      %v1509 = vadd.f32 %v1477, %v1493
      %v1510 = vadd.f32 %v1478, %v1494
      %v1511 = vadd.f32 %v1479, %v1495
      %v1512 = vadd.f32 %v1480, %v1496
      %v1513 = vadd.f32 %v1481, %v1497
      %v1514 = vadd.f32 %v1482, %v1498
      %v1515 = vadd.f32 %v1483, %v1499
      %vm1516 = vcmask 72704
      %1517 = vst.msk [vmem:[%s432] sm:$0xff] %vm1516, %v1500
      %1518 = vst.msk [vmem:[%s432 + $0x8] sm:$0xff] %vm1516, %v1501
      %1519 = vst.msk [vmem:[%s432 + $0x10] sm:$0xff] %vm1516, %v1502
      %1520 = vst.msk [vmem:[%s432 + $0x18] sm:$0xff] %vm1516, %v1503
      %1521 = vst.msk [vmem:[%s432 + $0x20] sm:$0xff] %vm1516, %v1504
      %1522 = vst.msk [vmem:[%s432 + $0x28] sm:$0xff] %vm1516, %v1505
      %1523 = vst.msk [vmem:[%s432 + $0x30] sm:$0xff] %vm1516, %v1506
      %1524 = vst.msk [vmem:[%s432 + $0x38] sm:$0xff] %vm1516, %v1507
      %1525 = vst.msk [vmem:[%s432 + $0x40] sm:$0xff] %vm1516, %v1508
      %1526 = vst.msk [vmem:[%s432 + $0x48] sm:$0xff] %vm1516, %v1509
      %1527 = vst.msk [vmem:[%s432 + $0x50] sm:$0xff] %vm1516, %v1510
      %1528 = vst.msk [vmem:[%s432 + $0x58] sm:$0xff] %vm1516, %v1511
      %1529 = vst.msk [vmem:[%s432 + $0x60] sm:$0xff] %vm1516, %v1512
      %1530 = vst.msk [vmem:[%s432 + $0x68] sm:$0xff] %vm1516, %v1513
      %1531 = vst.msk [vmem:[%s432 + $0x70] sm:$0xff] %vm1516, %v1514
      %1532 = vst.msk [vmem:[%s432 + $0x78] sm:$0xff] %vm1516, %v1515
      %s1533 = smul.u32 16, %s22
      %p1534 = scmp.lt.s32.totalorder %s1533, 63
      %s1535 = scalar_select %p1534, %s1533, 63
      %s1536 = smul.addr %s1535, 8
      %s1537 = scalar_lea.vmem %s11, %s1536
      // Predicated region
      $region65: #{tpu_custom_call.1} parent=63 // pred_check
        %p1538 = pneg %p286
      $region66: #{tpu_custom_call.1} parent=63 // pred_check_branch
        %1540 = sbr.rel (%p1538) target = $region68
      $region67: #{tpu_custom_call.1} parent=63 // pred_region
        %s1541 = smul.u32 16, %s22
      $region68: #{tpu_custom_call.1} parent=63 // pred_fallthru
        _
    $region64: #{tpu_custom_call.1} parent=5 // pred_fallthru
      _
    %p1542 = scmp.le.s32.totalorder 2, %s17
    // Predicated region
    $region69: #{tpu_custom_call.1} parent=5 // pred_check
      %p1543 = pneg %p1542
    $region70: #{tpu_custom_call.1} parent=5 // pred_check_branch
      %1545 = sbr.rel (%p1543) target = $region72
    $region71: #{tpu_custom_call.1} parent=5 // pred_region
      %s1546 = ssub.s32 %s17, 2
      // Predicated region
      $region73: #{tpu_custom_call.1} parent=71 // pred_check
        %p1547 = pneg %p292
      $region74: #{tpu_custom_call.1} parent=71 // pred_check_branch
        %1549 = sbr.rel (%p1547) target = $region76
      $region75: #{tpu_custom_call.1} parent=71 // pred_region
        %s1550 = smul.u32 16, %s23
        %p1551 = scmp.lt.s32.totalorder %s1550, 63
        %s1552 = scalar_select %p1551, %s1550, 63
        %s1553 = smul.addr %s1552, 8
        %s1554 = scalar_lea.vmem %s11, %s1553
      $region76: #{tpu_custom_call.1} parent=71 // pred_fallthru
        _
    $region72: #{tpu_custom_call.1} parent=5 // pred_fallthru
      _
  $region6: #{tpu_custom_call.1} parent=0 // loop_footer
    %s21 = sadd.s32 1, %s17
  $region7: #{tpu_custom_call.1} parent=0 // loop_footer_branch
    %16 = sbr.rel target = $region3
  $region8: #{tpu_custom_call.1} parent=0 // loop_exit
    _

</llo_original>
